<compile_context>
chip_gen: v5e
topology: v5e:2x2
jax: 0.10.0
libtpu: 0.0.40
codegen_flags: <defaults>
</compile_context>

<pallas_src>
import functools

import jax
import jax.numpy as jnp
from jax.experimental import pallas as pl
from jax.experimental.pallas import tpu as pltpu

F32 = jnp.float32
BF16 = jnp.bfloat16


def _round_up(x, m):
    return ((x + m - 1) // m) * m


# --------------------------------------------------------------------------
# Fused matmul (+bias +activation [+softmax*fuse]) kernel
# --------------------------------------------------------------------------
def _mm_kernel(x_ref, w_ref, b_ref, o_ref, *, act, alpha):
    y = jnp.dot(x_ref[0], w_ref[0], preferred_element_type=jnp.float32) + b_ref[0]
    if act == "relu":
        y = jnp.maximum(y, 0.0)
    elif act == "prelu":
        y = jnp.where(y > 0.0, y, alpha * y)
    o_ref[0] = y.astype(o_ref.dtype)


def _mm_softmax_mul_kernel(x_ref, w_ref, b_ref, fuse_ref, o_ref):
    # attention heads: 1x1 conv logits -> Softmax2d over channels -> * fuse1,
    # all while the data is still in vregs (EUP/XLU/VPU ride free next to MXU).
    y = jnp.dot(x_ref[0], w_ref[0], preferred_element_type=jnp.float32) + b_ref[0]
    y = y - jnp.max(y, axis=-1, keepdims=True)
    e = jnp.exp(y)
    y = e * pl.reciprocal(jnp.sum(e, axis=-1, keepdims=True), approx=True)
    o_ref[0] = (y * fuse_ref[0].astype(jnp.float32)).astype(o_ref.dtype)


def matmul_bias_act(x, w, b, act="none", alpha=0.25, out_dtype=BF16, fuse=None):
    """Batched (Hd, M, K) @ (Hd, K, N) + bias with fused epilogue.

    * bf16 MXU operands, f32 accumulation, BN scale pre-folded into `w`
    * tn = 256 when N%256==0 (layer3/4), else 128, else full N
    * optional `fuse` (M, N): fused Softmax2d * fuse1 epilogue (attention heads)
    """
    Hd, M, K = x.shape
    N = w.shape[-1]

    tm = min(512, _round_up(max(M, 1), 8))
    Mp = _round_up(M, tm)
    if Mp != M:
        x = jnp.pad(x, ((0, 0), (0, Mp - M), (0, 0)))
    if N % 256 == 0:
        tn = 256
    elif N % 128 == 0:
        tn = 128
    else:
        tn = N
    grid = (Hd, Mp // tm, N // tn)

    xb = x.astype(BF16)
    wb = w.astype(BF16)
    b3 = b.reshape(Hd, 1, N).astype(F32)

    in_specs = [
        pl.BlockSpec((1, tm, K), lambda h, i, j: (h, i, 0)),
        pl.BlockSpec((1, K, tn), lambda h, i, j: (h, 0, j)),
        pl.BlockSpec((1, 1, tn), lambda h, i, j: (h, 0, j)),
    ]
    args = [xb, wb, b3]
    elt_out = jnp.dtype(out_dtype).itemsize
    need = 2 * (tm * K * 2 + K * tn * 2 + tn * 4 + tm * tn * elt_out)

    if fuse is not None:
        assert tn == N, "softmax fusion needs the full channel dim in one tile"
        f = fuse.reshape(1, M, N)
        if Mp != M:
            f = jnp.pad(f, ((0, 0), (0, Mp - M), (0, 0)))
        in_specs.append(pl.BlockSpec((1, tm, tn), lambda h, i, j: (0, i, j)))
        args.append(f.astype(BF16))
        need += 2 * tm * tn * 2
        kernel = _mm_softmax_mul_kernel
    else:
        kernel = functools.partial(_mm_kernel, act=act, alpha=float(alpha))

    vmem_limit = int(min(32 * 1024 * 1024, max(2 * need, 16 * 1024 * 1024)))
    out = pl.pallas_call(
        kernel,
        out_shape=jax.ShapeDtypeStruct((Hd, Mp, N), out_dtype),
        grid=grid,
        in_specs=in_specs,
        out_specs=pl.BlockSpec((1, tm, tn), lambda h, i, j: (h, i, j)),
        compiler_params=pltpu.CompilerParams(
            dimension_semantics=("parallel", "parallel", "parallel"),
            vmem_limit_bytes=vmem_limit),
    )(*args)
    return out[:, :M, :] if Mp != M else out


# --------------------------------------------------------------------------
# Fully in-kernel 3x3 / stride-1 / pad-1 convolution (no im2col in HBM)
# --------------------------------------------------------------------------
def _conv3x3_kernel(x_ref, w_ref, b_ref, o_ref, *, offs, act, alpha):
    # x_ref: (rows_pad, Cin) f32 -- flattened, zero-padded NHWC image rows
    # w_ref: (9, Cin, Cout) bf16 tap-major; b_ref: (1, Cout) f32; o_ref: (P, Cout)
    P, Cout = o_ref.shape
    acc = jnp.zeros((P, Cout), jnp.float32)
    for t, off in enumerate(offs):  # 9 static row-window offsets
        win = x_ref[pl.ds(off, P), :].astype(jnp.bfloat16)
        acc = acc + jnp.dot(win, w_ref[t], preferred_element_type=jnp.float32)
    acc = acc + b_ref[...]
    if act == "relu":
        acc = jnp.maximum(acc, 0.0)
    elif act == "prelu":
        acc = jnp.where(acc > 0.0, acc, alpha * acc)
    o_ref[...] = acc.astype(o_ref.dtype)


def conv3x3_fused(x, w, b, *, act="none", alpha=0.25, residual=None, out_dtype=BF16):
    """3x3 stride-1 pad-1 conv for a stack of heads, computed fully in-kernel.

    x: (Hd, B, H, W, Cin); w: (Hd, 9, Cin, Cout) (BN folded); b: (Hd, Cout).
    residual: optional (Hd, B, H, W, Cout); added (plus final ReLU) inside the
              XLA extraction fusion that also strips the junk halo rows.
    """
    Hd, B, H, W, Cin = x.shape
    Cout = w.shape[-1]
    Hp, Wp = H + 2, W + 2
    rows = B * Hp * Wp
    P = rows - 2 * Wp                    # flat output rows (some are junk halo)
    rows_pad = _round_up(rows + 2, 8)    # max in-kernel read index is rows + 1

    # pad + flatten (one fused XLA pass, f32 staging keeps row slices unpacked)
    xp = jnp.pad(x.astype(F32), ((0, 0), (0, 0), (1, 1), (1, 1), (0, 0)))
    xf = jnp.pad(xp.reshape(Hd, rows, Cin), ((0, 0), (0, rows_pad - rows), (0, 0)))

    offs = tuple(di * Wp + dj for di in range(3) for dj in range(3))
    kern_act = "none" if residual is not None else act

    need = 2 * (rows_pad * Cin * 4 + 9 * Cin * Cout * 2 + Cout * 4 + P * Cout * 2)
    need += P * Cout * 4
    vmem_limit = int(min(32 * 1024 * 1024, max(2 * need, 16 * 1024 * 1024)))

    out_flat = pl.pallas_call(
        functools.partial(_conv3x3_kernel, offs=offs, act=kern_act, alpha=float(alpha)),
        out_shape=jax.ShapeDtypeStruct((Hd, P, Cout), BF16),
        grid=(Hd,),
        in_specs=[
            pl.BlockSpec((None, rows_pad, Cin), lambda h: (h, 0, 0)),
            pl.BlockSpec((None, 9, Cin, Cout), lambda h: (h, 0, 0, 0)),
            pl.BlockSpec((None, 1, Cout), lambda h: (h, 0, 0)),
        ],
        out_specs=pl.BlockSpec((None, P, Cout), lambda h: (h, 0, 0)),
        compiler_params=pltpu.CompilerParams(
            dimension_semantics=("parallel",),
            vmem_limit_bytes=vmem_limit),
    )(xf, w.astype(BF16), b.reshape(Hd, 1, Cout).astype(F32))

    # Re-embed flat rows in the padded grid and strip halo/junk rows.  XLA
    # fuses this (and the optional residual add + ReLU) into one pass.
    full = jnp.pad(out_flat, ((0, 0), (0, rows - P), (0, 0)))
    y = full.reshape(Hd, B, Hp, Wp, Cout)[:, :, :H, :W, :]
    if residual is not None:
        y = jnp.maximum(y.astype(F32) + residual.astype(F32), 0.0)
    return y.astype(out_dtype)


def conv3x3_enc(x, p, act="relu", residual=None):
    r = None if residual is None else residual[None]
    return conv3x3_fused(x[None], p["w"][None], p["b"][None], act=act, residual=r)[0]


# --------------------------------------------------------------------------
# Predict heads: 8 x (1x1 conv, 64 -> 1) as a VPU multiply-reduce
# --------------------------------------------------------------------------
def _predict_kernel(x_ref, w_ref, b_ref, o_ref):
    x = x_ref[...].astype(jnp.float32)          # (8, M, 64)
    y = jnp.sum(x * w_ref[...], axis=-1)        # (8, M)  cross-lane reduce (XLU)
    o_ref[...] = y + b_ref[...]


def predict_heads(pred_in, p):
    Hd, M, _ = pred_in.shape
    return pl.pallas_call(
        _predict_kernel,
        out_shape=jax.ShapeDtypeStruct((Hd, M), F32),
    )(pred_in, p["w"], p["b"])


# --------------------------------------------------------------------------
# Remaining convolutions via im2col (conv0 7x7/s2 and the 3 stride-2 3x3s)
# --------------------------------------------------------------------------
def _extract_patches(x, kh, kw, stride, pad):
    # XLA glue; only used for the 4 strided convs of the whole network.
    if pad > 0:
        x = jnp.pad(x, ((0, 0), (pad, pad), (pad, pad), (0, 0)))
    N, Hp, Wp, C = x.shape
    Ho = (Hp - kh) // stride + 1
    Wo = (Wp - kw) // stride + 1
    cols = []
    for i in range(kh):
        for j in range(kw):
            cols.append(x[:, i:i + stride * Ho:stride, j:j + stride * Wo:stride, :])
    return jnp.concatenate(cols, axis=-1), Ho, Wo


def conv_im2col(x, p, k, stride, pad, act="relu", out_dtype=BF16):
    B = x.shape[0]
    patches, Ho, Wo = _extract_patches(x.astype(BF16), k, k, stride, pad)
    K = patches.shape[-1]                      # conv0 keeps K=196 (no pad to 256)
    w = p["w"].reshape(K, -1)
    y = matmul_bias_act(patches.reshape(1, B * Ho * Wo, K), w[None], p["b"][None],
                        act=act, out_dtype=out_dtype)
    return y.reshape(B, Ho, Wo, -1)


def conv1x1(x, p, act="none", alpha=0.25, stride=1, out_dtype=BF16):
    if stride != 1:
        x = x[:, ::stride, ::stride, :]
    B, H, W, C = x.shape
    w = p["w"].reshape(C, -1)
    y = matmul_bias_act(x.reshape(1, B * H * W, C), w[None], p["b"][None],
                        act=act, alpha=alpha, out_dtype=out_dtype)
    return y.reshape(B, H, W, -1)


def maxpool2(x):
    N, H, W, C = x.shape
    return x.reshape(N, H // 2, 2, W // 2, 2, C).max(axis=(2, 4))


def upsample_bilinear(x, h, w, out_dtype=None):
    # TODO(synk): F.upsample(mode='bilinear') historically used align_corners=True;
    #             jax.image.resize matches align_corners=False semantics.
    N, _, _, C = x.shape
    out_dtype = out_dtype or x.dtype
    y = jax.image.resize(x.astype(F32), (N, h, w, C), method="bilinear")
    return y.astype(out_dtype)


# --------------------------------------------------------------------------
# Deterministic parameter construction (synthetic, no checkpoint)
# --------------------------------------------------------------------------
class ParamGen:
    def __init__(self, key):
        self.key = key

    def normal(self, shape, std=1.0):
        self.key, sub = jax.random.split(self.key)
        return jax.random.normal(sub, shape, F32) * std


def make_conv_bn(pg, cin, cout, k, conv_bias=True, with_bn=True):
    fan_in = cin * k * k
    w = pg.normal((cout, cin, k, k), std=0.5 * (2.0 / fan_in) ** 0.5)
    b = pg.normal((cout,), 0.01) if conv_bias else jnp.zeros((cout,), F32)
    if with_bn:
        gamma = 1.0 + pg.normal((cout,), 0.05)
        beta = pg.normal((cout,), 0.05)
        mean = pg.normal((cout,), 0.05)
        var = 1.0 + jnp.abs(pg.normal((cout,), 0.05))
        s = gamma / jnp.sqrt(var + 1e-5)
        bias = (b - mean) * s + beta
    else:
        s = jnp.ones((cout,), F32)
        bias = b
    # BN scale folded into the weight; tap-major layout (k*k, cin, cout), bf16.
    wm = jnp.transpose(w * s[:, None, None, None], (2, 3, 1, 0)).reshape(k * k, cin, cout)
    return {"w": wm.astype(BF16), "b": bias.astype(F32)}


def _stack_heads(convs):
    return {"w": jnp.stack([c["w"] for c in convs]),
            "b": jnp.stack([c["b"] for c in convs])}


def _stack_triples(triples):
    out = {n: _stack_heads([t[n] for t in triples]) for n in ("a", "b", "c")}
    hd = out["c"]["w"].shape[0]
    out["c"]["w"] = out["c"]["w"].reshape(hd, 64, 64)   # 1x1 conv -> plain matmul weight
    return out


# static ResNet34 layer config: (name, cin, cout, n_blocks, first_stride)
RESNET34_LAYERS = (
    ("layer1", 64, 64, 3, 1),
    ("layer2", 64, 128, 4, 2),
    ("layer3", 128, 256, 6, 2),
    ("layer4", 256, 512, 3, 2),
)


def init_daf_params(key):
    pg = ParamGen(key)
    p = {}
    # encoder.conv1: Conv2d(4, 64, 7, 2, 3, bias=False) + bn1
    p["conv0"] = make_conv_bn(pg, 4, 64, 7, conv_bias=False)

    for name, cin, cout, n_blocks, first_stride in RESNET34_LAYERS:
        blocks = []
        for i in range(n_blocks):
            s = first_stride if i == 0 else 1
            ci = cin if i == 0 else cout
            blocks.append({
                "c1": make_conv_bn(pg, ci, cout, 3, conv_bias=False),
                "c2": make_conv_bn(pg, cout, cout, 3, conv_bias=False),
                "down": (make_conv_bn(pg, ci, cout, 1, conv_bias=False)
                         if (s != 1 or ci != cout) else None),
            })
        p[name] = blocks

    # decoder 1x1 "down" convs
    p["down4"] = make_conv_bn(pg, 512, 64, 1)
    p["down3"] = make_conv_bn(pg, 256, 64, 1)
    p["down2"] = make_conv_bn(pg, 128, 64, 1)
    p["down1"] = make_conv_bn(pg, 64, 64, 1)

    def triple(cin, last_bn):
        return {"a": make_conv_bn(pg, cin, 64, 3),
                "b": make_conv_bn(pg, 64, 64, 3),
                "c": make_conv_bn(pg, 64, 64, 1, with_bn=last_bn)}

    # same-shape decoder heads stacked on a leading head axis (batched kernels)
    p["fuse1"] = _stack_triples([triple(256, True)])
    p["attention"] = _stack_triples([triple(128, False) for _ in range(4)])  # heads 4,3,2,1
    p["refine"] = _stack_triples([triple(128, True) for _ in range(4)])      # heads 4,3,2,1

    pcs = [make_conv_bn(pg, 64, 1, 1, with_bn=False) for _ in range(8)]      # p4..p1, p4_2..p1_2
    p["predict"] = {
        "w": jnp.stack([c["w"].astype(F32).reshape(64) for c in pcs]).reshape(8, 1, 64),
        "b": jnp.stack([c["b"] for c in pcs]).reshape(8, 1),
    }
    return p


# --------------------------------------------------------------------------
# Forward pass
# --------------------------------------------------------------------------
def _basic_block(x, blk, stride):
    if stride == 1:
        out = conv3x3_enc(x, blk["c1"], act="relu")
    else:
        out = conv_im2col(x, blk["c1"], 3, stride, 1, act="relu")
    if blk["down"] is not None:
        idn = conv1x1(x, blk["down"], act="none", stride=stride)
    else:
        idn = x
    # conv2 with the residual add + ReLU fused into its extraction pass
    return conv3x3_enc(out, blk["c2"], act="none", residual=idn)


def _run_layer(x, blocks, first_stride):
    for i, blk in enumerate(blocks):
        x = _basic_block(x, blk, first_stride if i == 0 else 1)
    return x


def run_triple(xs, tp, last, alpha=0.25, fuse=None):
    """xs: (Hd, B, H, W, Cin). conv3x3 -> conv3x3 -> conv1x1 for all heads at once."""
    Hd, B, H, W, _ = xs.shape
    M = B * H * W
    y = conv3x3_fused(xs, tp["a"]["w"], tp["a"]["b"], act="prelu", alpha=alpha)
    y = conv3x3_fused(y, tp["b"]["w"], tp["b"]["b"], act="prelu", alpha=alpha)
    y = y.reshape(Hd, M, 64)
    if last == "softmax_mul":       # attention heads: Softmax2d * fuse1 fused in epilogue
        return matmul_bias_act(y, tp["c"]["w"], tp["c"]["b"], act="none",
                               out_dtype=BF16, fuse=fuse)
    return matmul_bias_act(y, tp["c"]["w"], tp["c"]["b"], act="prelu",
                           alpha=alpha, out_dtype=BF16)


def daf_forward(params, x):
    B, H, W, _ = x.shape
    # --- ResNet34 encoder (bf16 activations throughout) ---
    layer0 = conv_im2col(x, params["conv0"], 7, 2, 3, act="relu")
    l1 = maxpool2(layer0)
    layer1 = _run_layer(l1, params["layer1"], 1)
    layer2 = _run_layer(layer1, params["layer2"], 2)
    layer3 = _run_layer(layer2, params["layer3"], 2)
    layer4 = _run_layer(layer3, params["layer4"], 2)

    h1, w1 = layer1.shape[1], layer1.shape[2]
    M = B * h1 * w1

    down4 = upsample_bilinear(conv1x1(layer4, params["down4"], act="prelu"), h1, w1)
    down3 = upsample_bilinear(conv1x1(layer3, params["down3"], act="prelu"), h1, w1)
    down2 = upsample_bilinear(conv1x1(layer2, params["down2"], act="prelu"), h1, w1)
    down1 = conv1x1(layer1, params["down1"], act="prelu")

    down_stack = jnp.stack([down4, down3, down2, down1], axis=0)        # (4,B,h1,w1,64)

    fuse_in = jnp.concatenate([down4, down3, down2, down1], axis=-1)    # (B,h1,w1,256)
    fuse_flat = run_triple(fuse_in[None], params["fuse1"], "prelu")[0]  # (M,64) bf16
    fuse_map = fuse_flat.reshape(B, h1, w1, 64)

    att_in = jnp.concatenate(
        [down_stack, jnp.broadcast_to(fuse_map[None], down_stack.shape)], axis=-1)
    att_fuse = run_triple(att_in, params["attention"], "softmax_mul",
                          fuse=fuse_flat)                               # (4,M,64) = att*fuse1

    ref_in = jnp.concatenate(
        [down_stack, att_fuse.reshape(4, B, h1, w1, 64)], axis=-1)
    refine = run_triple(ref_in, params["refine"], "prelu")              # (4,M,64)

    pred_in = jnp.concatenate([down_stack.reshape(4, M, 64), refine], axis=0)
    preds = predict_heads(pred_in, params["predict"]).reshape(8, B, h1, w1, 1)
    # head order: predict4, predict3, predict2, predict1, predict4_2, ..., predict1_2
    p4, p3, p2, p1, p4_2, p3_2, p2_2, p1_2 = [preds[i] for i in range(8)]

    up = lambda t: upsample_bilinear(t.astype(F32), H, W)
    return (up(p1), up(p2), up(p3), up(p4), up(p1_2), up(p2_2), up(p3_2), up(p4_2))


# --------------------------------------------------------------------------
def _selfcheck_conv3x3():
    """Tiny correctness check of the in-kernel 3x3 conv vs lax.conv."""
    k1, k2 = jax.random.split(jax.random.PRNGKey(42))
    x = jax.random.normal(k1, (1, 2, 8, 8, 16), F32).astype(BF16).astype(F32)
    w = (jax.random.normal(k2, (1, 9, 16, 32), F32) * 0.2).astype(BF16).astype(F32)
    b = jnp.zeros((1, 32), F32)
    y = conv3x3_fused(x, w, b, act="none", out_dtype=F32)[0]
    ref = jax.lax.conv_general_dilated(
        x[0], w[0].reshape(3, 3, 16, 32), (1, 1), "SAME",
        dimension_numbers=("NHWC", "HWIO", "NHWC"))
    err = float(jnp.max(jnp.abs(y - ref)))
    assert err < 0.1, f"conv3x3_fused self-check failed, max abs err = {err}"


if __name__ == "__main__":
    _selfcheck_conv3x3()

    key = jax.random.PRNGKey(0)
    pkey, xkey = jax.random.split(key)
    params = init_daf_params(pkey)
    # NHWC input; corresponds to torch NCHW input of shape (2, 4, 64, 64)
    x = jax.random.normal(xkey, (2, 64, 64, 4), F32)

    fwd = jax.jit(daf_forward)
    outs = fwd(params, x)
    jax.block_until_ready(outs)

    assert len(outs) == 8
    for o in outs:
        assert o.shape == (2, 64, 64, 1), o.shape
        assert bool(jnp.all(jnp.isfinite(o)))
    print("KERNEL_OK")
</pallas_src>

<mosaic_0001>
module attributes {stable_mosaic.version = 11 : i64} {
  func.func @_conv3x3_kernel(%arg0: i32, %arg1: memref<1x208x16xf32, #tpu.memory_space<vmem>>, %arg2: memref<1x9x16x32xbf16, #tpu.memory_space<vmem>>, %arg3: memref<1x1x32xf32, #tpu.memory_space<vmem>>, %arg4: memref<1x180x32xbf16, #tpu.memory_space<vmem>>) attributes {dimension_semantics = [#tpu.dimension_semantics<parallel>], iteration_bounds = array<i64: 1>, scalar_prefetch = 0 : i64, scratch_operands = 0 : i64, tpu.core_type = #tpu.core_type<tc>, window_params = [{transform_indices = @transform_0, window_bounds = array<i64: 1, 208, 16>}, {transform_indices = @transform_1, window_bounds = array<i64: 1, 9, 16, 32>}, {transform_indices = @transform_2, window_bounds = array<i64: 1, 1, 32>}, {transform_indices = @transform_3, window_bounds = array<i64: 1, 180, 32>}]} {
    %cst = arith.constant 0.000000e+00 : f32
    %0 = vector.broadcast %cst : f32 to vector<180x32xf32>
    %c0 = arith.constant 0 : index
    %c0_0 = arith.constant 0 : index
    %c0_1 = arith.constant 0 : index
    %1 = vector.load %arg1[%c0, %c0_0, %c0_1] : memref<1x208x16xf32, #tpu.memory_space<vmem>>, vector<1x180x16xf32>
    %2 = vector.shape_cast %1 : vector<1x180x16xf32> to vector<180x16xf32>
    %3 = arith.truncf %2 : vector<180x16xf32> to vector<180x16xbf16>
    %c0_2 = arith.constant 0 : index
    %c0_3 = arith.constant 0 : index
    %c0_4 = arith.constant 0 : index
    %c0_5 = arith.constant 0 : index
    %4 = vector.load %arg2[%c0_2, %c0_3, %c0_4, %c0_5] : memref<1x9x16x32xbf16, #tpu.memory_space<vmem>>, vector<1x1x16x32xbf16>
    %5 = vector.shape_cast %4 : vector<1x1x16x32xbf16> to vector<16x32xbf16>
    %cst_6 = arith.constant dense<0.000000e+00> : vector<180x32xf32>
    %6 = tpu.matmul %3, %5, %cst_6 {dimension_numbers = #tpu.dot_dimension_numbers<[1], [0], [0], [1], [0, 0, 1, 1], [], []>} : vector<180x16xbf16>, vector<16x32xbf16>, vector<180x32xf32> -> vector<180x32xf32>
    %7 = arith.addf %0, %6 : vector<180x32xf32>
    %c0_7 = arith.constant 0 : index
    %c1 = arith.constant 1 : index
    %c0_8 = arith.constant 0 : index
    %8 = vector.load %arg1[%c0_7, %c1, %c0_8] : memref<1x208x16xf32, #tpu.memory_space<vmem>>, vector<1x180x16xf32>
    %9 = vector.shape_cast %8 : vector<1x180x16xf32> to vector<180x16xf32>
    %10 = arith.truncf %9 : vector<180x16xf32> to vector<180x16xbf16>
    %c0_9 = arith.constant 0 : index
    %c1_10 = arith.constant 1 : index
    %c0_11 = arith.constant 0 : index
    %c0_12 = arith.constant 0 : index
    %11 = vector.load %arg2[%c0_9, %c1_10, %c0_11, %c0_12] : memref<1x9x16x32xbf16, #tpu.memory_space<vmem>>, vector<1x1x16x32xbf16>
    %12 = vector.shape_cast %11 : vector<1x1x16x32xbf16> to vector<16x32xbf16>
    %cst_13 = arith.constant dense<0.000000e+00> : vector<180x32xf32>
    %13 = tpu.matmul %10, %12, %cst_13 {dimension_numbers = #tpu.dot_dimension_numbers<[1], [0], [0], [1], [0, 0, 1, 1], [], []>} : vector<180x16xbf16>, vector<16x32xbf16>, vector<180x32xf32> -> vector<180x32xf32>
    %14 = arith.addf %7, %13 : vector<180x32xf32>
    %c0_14 = arith.constant 0 : index
    %c2 = arith.constant 2 : index
    %c0_15 = arith.constant 0 : index
    %15 = vector.load %arg1[%c0_14, %c2, %c0_15] : memref<1x208x16xf32, #tpu.memory_space<vmem>>, vector<1x180x16xf32>
    %16 = vector.shape_cast %15 : vector<1x180x16xf32> to vector<180x16xf32>
    %17 = arith.truncf %16 : vector<180x16xf32> to vector<180x16xbf16>
    %c0_16 = arith.constant 0 : index
    %c2_17 = arith.constant 2 : index
    %c0_18 = arith.constant 0 : index
    %c0_19 = arith.constant 0 : index
    %18 = vector.load %arg2[%c0_16, %c2_17, %c0_18, %c0_19] : memref<1x9x16x32xbf16, #tpu.memory_space<vmem>>, vector<1x1x16x32xbf16>
    %19 = vector.shape_cast %18 : vector<1x1x16x32xbf16> to vector<16x32xbf16>
    %cst_20 = arith.constant dense<0.000000e+00> : vector<180x32xf32>
    %20 = tpu.matmul %17, %19, %cst_20 {dimension_numbers = #tpu.dot_dimension_numbers<[1], [0], [0], [1], [0, 0, 1, 1], [], []>} : vector<180x16xbf16>, vector<16x32xbf16>, vector<180x32xf32> -> vector<180x32xf32>
    %21 = arith.addf %14, %20 : vector<180x32xf32>
    %c0_21 = arith.constant 0 : index
    %c10 = arith.constant 10 : index
    %c0_22 = arith.constant 0 : index
    %22 = vector.load %arg1[%c0_21, %c10, %c0_22] : memref<1x208x16xf32, #tpu.memory_space<vmem>>, vector<1x180x16xf32>
    %23 = vector.shape_cast %22 : vector<1x180x16xf32> to vector<180x16xf32>
    %24 = arith.truncf %23 : vector<180x16xf32> to vector<180x16xbf16>
    %c0_23 = arith.constant 0 : index
    %c3 = arith.constant 3 : index
    %c0_24 = arith.constant 0 : index
    %c0_25 = arith.constant 0 : index
    %25 = vector.load %arg2[%c0_23, %c3, %c0_24, %c0_25] : memref<1x9x16x32xbf16, #tpu.memory_space<vmem>>, vector<1x1x16x32xbf16>
    %26 = vector.shape_cast %25 : vector<1x1x16x32xbf16> to vector<16x32xbf16>
    %cst_26 = arith.constant dense<0.000000e+00> : vector<180x32xf32>
    %27 = tpu.matmul %24, %26, %cst_26 {dimension_numbers = #tpu.dot_dimension_numbers<[1], [0], [0], [1], [0, 0, 1, 1], [], []>} : vector<180x16xbf16>, vector<16x32xbf16>, vector<180x32xf32> -> vector<180x32xf32>
    %28 = arith.addf %21, %27 : vector<180x32xf32>
    %c0_27 = arith.constant 0 : index
    %c11 = arith.constant 11 : index
    %c0_28 = arith.constant 0 : index
    %29 = vector.load %arg1[%c0_27, %c11, %c0_28] : memref<1x208x16xf32, #tpu.memory_space<vmem>>, vector<1x180x16xf32>
    %30 = vector.shape_cast %29 : vector<1x180x16xf32> to vector<180x16xf32>
    %31 = arith.truncf %30 : vector<180x16xf32> to vector<180x16xbf16>
    %c0_29 = arith.constant 0 : index
    %c4 = arith.constant 4 : index
    %c0_30 = arith.constant 0 : index
    %c0_31 = arith.constant 0 : index
    %32 = vector.load %arg2[%c0_29, %c4, %c0_30, %c0_31] : memref<1x9x16x32xbf16, #tpu.memory_space<vmem>>, vector<1x1x16x32xbf16>
    %33 = vector.shape_cast %32 : vector<1x1x16x32xbf16> to vector<16x32xbf16>
    %cst_32 = arith.constant dense<0.000000e+00> : vector<180x32xf32>
    %34 = tpu.matmul %31, %33, %cst_32 {dimension_numbers = #tpu.dot_dimension_numbers<[1], [0], [0], [1], [0, 0, 1, 1], [], []>} : vector<180x16xbf16>, vector<16x32xbf16>, vector<180x32xf32> -> vector<180x32xf32>
    %35 = arith.addf %28, %34 : vector<180x32xf32>
    %c0_33 = arith.constant 0 : index
    %c12 = arith.constant 12 : index
    %c0_34 = arith.constant 0 : index
    %36 = vector.load %arg1[%c0_33, %c12, %c0_34] : memref<1x208x16xf32, #tpu.memory_space<vmem>>, vector<1x180x16xf32>
    %37 = vector.shape_cast %36 : vector<1x180x16xf32> to vector<180x16xf32>
    %38 = arith.truncf %37 : vector<180x16xf32> to vector<180x16xbf16>
    %c0_35 = arith.constant 0 : index
    %c5 = arith.constant 5 : index
    %c0_36 = arith.constant 0 : index
    %c0_37 = arith.constant 0 : index
    %39 = vector.load %arg2[%c0_35, %c5, %c0_36, %c0_37] : memref<1x9x16x32xbf16, #tpu.memory_space<vmem>>, vector<1x1x16x32xbf16>
    %40 = vector.shape_cast %39 : vector<1x1x16x32xbf16> to vector<16x32xbf16>
    %cst_38 = arith.constant dense<0.000000e+00> : vector<180x32xf32>
    %41 = tpu.matmul %38, %40, %cst_38 {dimension_numbers = #tpu.dot_dimension_numbers<[1], [0], [0], [1], [0, 0, 1, 1], [], []>} : vector<180x16xbf16>, vector<16x32xbf16>, vector<180x32xf32> -> vector<180x32xf32>
    %42 = arith.addf %35, %41 : vector<180x32xf32>
    %c0_39 = arith.constant 0 : index
    %c20 = arith.constant 20 : index
    %c0_40 = arith.constant 0 : index
    %43 = vector.load %arg1[%c0_39, %c20, %c0_40] : memref<1x208x16xf32, #tpu.memory_space<vmem>>, vector<1x180x16xf32>
    %44 = vector.shape_cast %43 : vector<1x180x16xf32> to vector<180x16xf32>
    %45 = arith.truncf %44 : vector<180x16xf32> to vector<180x16xbf16>
    %c0_41 = arith.constant 0 : index
    %c6 = arith.constant 6 : index
    %c0_42 = arith.constant 0 : index
    %c0_43 = arith.constant 0 : index
    %46 = vector.load %arg2[%c0_41, %c6, %c0_42, %c0_43] : memref<1x9x16x32xbf16, #tpu.memory_space<vmem>>, vector<1x1x16x32xbf16>
    %47 = vector.shape_cast %46 : vector<1x1x16x32xbf16> to vector<16x32xbf16>
    %cst_44 = arith.constant dense<0.000000e+00> : vector<180x32xf32>
    %48 = tpu.matmul %45, %47, %cst_44 {dimension_numbers = #tpu.dot_dimension_numbers<[1], [0], [0], [1], [0, 0, 1, 1], [], []>} : vector<180x16xbf16>, vector<16x32xbf16>, vector<180x32xf32> -> vector<180x32xf32>
    %49 = arith.addf %42, %48 : vector<180x32xf32>
    %c0_45 = arith.constant 0 : index
    %c21 = arith.constant 21 : index
    %c0_46 = arith.constant 0 : index
    %50 = vector.load %arg1[%c0_45, %c21, %c0_46] : memref<1x208x16xf32, #tpu.memory_space<vmem>>, vector<1x180x16xf32>
    %51 = vector.shape_cast %50 : vector<1x180x16xf32> to vector<180x16xf32>
    %52 = arith.truncf %51 : vector<180x16xf32> to vector<180x16xbf16>
    %c0_47 = arith.constant 0 : index
    %c7 = arith.constant 7 : index
    %c0_48 = arith.constant 0 : index
    %c0_49 = arith.constant 0 : index
    %53 = vector.load %arg2[%c0_47, %c7, %c0_48, %c0_49] : memref<1x9x16x32xbf16, #tpu.memory_space<vmem>>, vector<1x1x16x32xbf16>
    %54 = vector.shape_cast %53 : vector<1x1x16x32xbf16> to vector<16x32xbf16>
    %cst_50 = arith.constant dense<0.000000e+00> : vector<180x32xf32>
    %55 = tpu.matmul %52, %54, %cst_50 {dimension_numbers = #tpu.dot_dimension_numbers<[1], [0], [0], [1], [0, 0, 1, 1], [], []>} : vector<180x16xbf16>, vector<16x32xbf16>, vector<180x32xf32> -> vector<180x32xf32>
    %56 = arith.addf %49, %55 : vector<180x32xf32>
    %c0_51 = arith.constant 0 : index
    %c22 = arith.constant 22 : index
    %c0_52 = arith.constant 0 : index
    %57 = vector.load %arg1[%c0_51, %c22, %c0_52] : memref<1x208x16xf32, #tpu.memory_space<vmem>>, vector<1x180x16xf32>
    %58 = vector.shape_cast %57 : vector<1x180x16xf32> to vector<180x16xf32>
    %59 = arith.truncf %58 : vector<180x16xf32> to vector<180x16xbf16>
    %c0_53 = arith.constant 0 : index
    %c8 = arith.constant 8 : index
    %c0_54 = arith.constant 0 : index
    %c0_55 = arith.constant 0 : index
    %60 = vector.load %arg2[%c0_53, %c8, %c0_54, %c0_55] : memref<1x9x16x32xbf16, #tpu.memory_space<vmem>>, vector<1x1x16x32xbf16>
    %61 = vector.shape_cast %60 : vector<1x1x16x32xbf16> to vector<16x32xbf16>
    %cst_56 = arith.constant dense<0.000000e+00> : vector<180x32xf32>
    %62 = tpu.matmul %59, %61, %cst_56 {dimension_numbers = #tpu.dot_dimension_numbers<[1], [0], [0], [1], [0, 0, 1, 1], [], []>} : vector<180x16xbf16>, vector<16x32xbf16>, vector<180x32xf32> -> vector<180x32xf32>
    %63 = arith.addf %56, %62 : vector<180x32xf32>
    %c0_57 = arith.constant 0 : index
    %c0_58 = arith.constant 0 : index
    %c0_59 = arith.constant 0 : index
    %64 = vector.load %arg3[%c0_57, %c0_58, %c0_59] : memref<1x1x32xf32, #tpu.memory_space<vmem>>, vector<1x1x32xf32>
    %65 = vector.shape_cast %64 : vector<1x1x32xf32> to vector<1x32xf32>
    %66 = vector.broadcast %65 : vector<1x32xf32> to vector<180x32xf32>
    %67 = arith.addf %63, %66 : vector<180x32xf32>
    %68 = arith.truncf %67 : vector<180x32xf32> to vector<180x32xbf16>
    %c0_60 = arith.constant 0 : index
    %c0_61 = arith.constant 0 : index
    %c0_62 = arith.constant 0 : index
    %69 = vector.load %arg4[%c0_60, %c0_61, %c0_62] : memref<1x180x32xbf16, #tpu.memory_space<vmem>>, vector<1x180x32xbf16>
    %70 = vector.shape_cast %69 : vector<1x180x32xbf16> to vector<180x32xbf16>
    %71 = vector.shape_cast %68 : vector<180x32xbf16> to vector<1x180x32xbf16>
    tpu.vector_store %arg4[%c0_60, %c0_61, %c0_62], %71 {strides = array<i32>} : memref<1x180x32xbf16, #tpu.memory_space<vmem>>, vector<1x180x32xbf16>,
    return
  }
  func.func @transform_0(%arg0: i32) -> (i32, i32, i32) {
    %c0_i32 = arith.constant 0 : i32
    %c0_i32_0 = arith.constant 0 : i32
    %c0_i32_1 = arith.constant 0 : i32
    return %arg0, %c0_i32, %c0_i32_0 : i32, i32, i32
  }
  func.func @transform_1(%arg0: i32) -> (i32, i32, i32, i32) {
    %c0_i32 = arith.constant 0 : i32
    %c0_i32_0 = arith.constant 0 : i32
    %c0_i32_1 = arith.constant 0 : i32
    %c0_i32_2 = arith.constant 0 : i32
    return %arg0, %c0_i32, %c0_i32_0, %c0_i32_1 : i32, i32, i32, i32
  }
  func.func @transform_2(%arg0: i32) -> (i32, i32, i32) {
    %c0_i32 = arith.constant 0 : i32
    %c0_i32_0 = arith.constant 0 : i32
    %c0_i32_1 = arith.constant 0 : i32
    return %arg0, %c0_i32, %c0_i32_0 : i32, i32, i32
  }
  func.func @transform_3(%arg0: i32) -> (i32, i32, i32) {
    %c0_i32 = arith.constant 0 : i32
    %c0_i32_0 = arith.constant 0 : i32
    %c0_i32_1 = arith.constant 0 : i32
    return %arg0, %c0_i32, %c0_i32_0 : i32, i32, i32
  }
}

</mosaic_0001>

<llo_original>
// kernel: tpu_custom_call.1
$region0: #{tpu_custom_call.1}
  #allocation0 [shape = 'u32[]', space=smem, size = 0x4, offset = 0x4, fixed_abs, tag = 'smem constant byte address 0x4 - core index']
  #allocation1 [shape = 'u32[72,128]{1,0:T(1,128)}', space=vmem, size = 0x9000, scoped, tag = 'internal scratch']
  %s0 = inlined_call_operand.vmem [shape: f32[1,208,16], index: 0, kind: input, shape index: {}]
  %s1 = inlined_call_operand.vmem [shape: bf16[1,9,16,32], index: 1, kind: input, shape index: {}]
  %s2 = inlined_call_operand.vmem [shape: f32[1,1,32], index: 2, kind: input, shape index: {}]
  %s3 = inlined_call_operand.vmem [shape: bf16[1,180,32], index: 3, kind: output, shape index: {}]
  %s4 = sld [smem:[#allocation0]]
  $region22: #{tpu_custom_call.1} parent=0
    _
  %s6 = ssub.s32 1, %s4
  %s7 = scalar_select 0, %s6, %s4
  // Predicated region
  $region2: #{tpu_custom_call.1} parent=0 // pred_check
    _
  $region3: #{tpu_custom_call.1} parent=0 // pred_check_branch
    %9 = sbr.rel (0) target = $region5
  $region4: #{tpu_custom_call.1} parent=0 // pred_region
    _
  $region5: #{tpu_custom_call.1} parent=0 // pred_fallthru
    _
  // Predicated region
  $region6: #{tpu_custom_call.1} parent=0 // pred_check
    _
  $region7: #{tpu_custom_call.1} parent=0 // pred_check_branch
    %11 = sbr.rel (0) target = $region9
  $region8: #{tpu_custom_call.1} parent=0 // pred_region
    _
  $region9: #{tpu_custom_call.1} parent=0 // pred_fallthru
    _
  // Predicated region
  $region10: #{tpu_custom_call.1} parent=0 // pred_check
    _
  $region11: #{tpu_custom_call.1} parent=0 // pred_check_branch
    %13 = sbr.rel (0) target = $region13
  $region12: #{tpu_custom_call.1} parent=0 // pred_region
    _
  $region13: #{tpu_custom_call.1} parent=0 // pred_fallthru
    _
  %v15 = vld [vmem:[%s0] sm:$0xff]
  %v16 = vld [vmem:[%s0 + $0x8] sm:$0xff]
  %v17 = vld [vmem:[%s0 + $0x10] sm:$0xff]
  %v18 = vld [vmem:[%s0 + $0x18] sm:$0xff]
  %v19 = vld [vmem:[%s0 + $0x20] sm:$0xff]
  %v20 = vld [vmem:[%s0 + $0x28] sm:$0xff]
  %v21 = vld [vmem:[%s0 + $0x30] sm:$0xff]
  %v22 = vld [vmem:[%s0 + $0x38] sm:$0xff]
  %v23 = vld [vmem:[%s0 + $0x40] sm:$0xff]
  %v24 = vld [vmem:[%s0 + $0x48] sm:$0xff]
  %v25 = vld [vmem:[%s0 + $0x50] sm:$0xff]
  %v26 = vld [vmem:[%s0 + $0x58] sm:$0xff]
  %v27 = vld [vmem:[%s0 + $0x60] sm:$0xff]
  %v28 = vld [vmem:[%s0 + $0x68] sm:$0xff]
  %v29 = vld [vmem:[%s0 + $0x70] sm:$0xff]
  %v30 = vld [vmem:[%s0 + $0x78] sm:$0xff]
  %v31 = vld [vmem:[%s0 + $0x80] sm:$0xff]
  %v32 = vld [vmem:[%s0 + $0x88] sm:$0xff]
  %v33 = vld [vmem:[%s0 + $0x90] sm:$0xff]
  %v34 = vld [vmem:[%s0 + $0x98] sm:$0xff]
  %v35 = vld [vmem:[%s0 + $0xa0] sm:$0xff]
  %v36 = vld [vmem:[%s0 + $0xa8] sm:$0xff]
  %v37 = vld [vmem:[%s0 + $0xb0] sm:$0xf]
  %v38 = vpack.c.bf16 %v16, %v15
  %v39 = vpack.c.bf16 %v18, %v17
  %v40 = vpack.c.bf16 %v20, %v19
  %v41 = vpack.c.bf16 %v22, %v21
  %v42 = vpack.c.bf16 %v24, %v23
  %v43 = vpack.c.bf16 %v26, %v25
  %v44 = vpack.c.bf16 %v28, %v27
  %v45 = vpack.c.bf16 %v30, %v29
  %v46 = vpack.c.bf16 %v32, %v31
  %v47 = vpack.c.bf16 %v34, %v33
  %v48 = vpack.c.bf16 %v36, %v35
  %v49 = vpack.c.bf16 %v37, %v37
  %v50 = vld [vmem:[%s1] sm:$0xf]
  %v51 = vld [vmem:[%s1 + $0x4] sm:$0xf]
  %v52 = vld [vmem:[%s0 + $0x1] sm:$0xff]
  %v53 = vld [vmem:[%s0 + $0x9] sm:$0xff]
  %v54 = vld [vmem:[%s0 + $0x11] sm:$0xff]
  %v55 = vld [vmem:[%s0 + $0x19] sm:$0xff]
  %v56 = vld [vmem:[%s0 + $0x21] sm:$0xff]
  %v57 = vld [vmem:[%s0 + $0x29] sm:$0xff]
  %v58 = vld [vmem:[%s0 + $0x31] sm:$0xff]
  %v59 = vld [vmem:[%s0 + $0x39] sm:$0xff]
  %v60 = vld [vmem:[%s0 + $0x41] sm:$0xff]
  %v61 = vld [vmem:[%s0 + $0x49] sm:$0xff]
  %v62 = vld [vmem:[%s0 + $0x51] sm:$0xff]
  %v63 = vld [vmem:[%s0 + $0x59] sm:$0xff]
  %v64 = vld [vmem:[%s0 + $0x61] sm:$0xff]
  %v65 = vld [vmem:[%s0 + $0x69] sm:$0xff]
  %v66 = vld [vmem:[%s0 + $0x71] sm:$0xff]
  %v67 = vld [vmem:[%s0 + $0x79] sm:$0xff]
  %v68 = vld [vmem:[%s0 + $0x81] sm:$0xff]
  %v69 = vld [vmem:[%s0 + $0x89] sm:$0xff]
  %v70 = vld [vmem:[%s0 + $0x91] sm:$0xff]
  %v71 = vld [vmem:[%s0 + $0x99] sm:$0xff]
  %v72 = vld [vmem:[%s0 + $0xa1] sm:$0xff]
  %v73 = vld [vmem:[%s0 + $0xa9] sm:$0xff]
  %v74 = vld [vmem:[%s0 + $0xb1] sm:$0xf]
  %v75 = vpack.c.bf16 %v53, %v52
  %v76 = vpack.c.bf16 %v55, %v54
  %v77 = vpack.c.bf16 %v57, %v56
  %v78 = vpack.c.bf16 %v59, %v58
  %v79 = vpack.c.bf16 %v61, %v60
  %v80 = vpack.c.bf16 %v63, %v62
  %v81 = vpack.c.bf16 %v65, %v64
  %v82 = vpack.c.bf16 %v67, %v66
  %v83 = vpack.c.bf16 %v69, %v68
  %v84 = vpack.c.bf16 %v71, %v70
  %v85 = vpack.c.bf16 %v73, %v72
  %v86 = vpack.c.bf16 %v74, %v74
  %s87 = scalar_lea.vmem %s1, 8
  %v88 = vld [vmem:[%s87] sm:$0xf]
  %v89 = vld [vmem:[%s87 + $0x4] sm:$0xf]
  %v92 = vunpack.c.l.b16 %v88
  %v93 = vunpack.c.l.b16 %v89
  %v94 = vpack.c.b16 %v93, %v92
  %vm96 = vcmask 130048
  %v98 = vsel %vm96, %v75, 0
  %v101 = vsel %vm96, %v76, 0
  %v104 = vsel %vm96, %v77, 0
  %v107 = vsel %vm96, %v78, 0
  %v110 = vsel %vm96, %v79, 0
  %v113 = vsel %vm96, %v80, 0
  %v116 = vsel %vm96, %v81, 0
  %v119 = vsel %vm96, %v82, 0
  %v122 = vsel %vm96, %v83, 0
  %v125 = vsel %vm96, %v84, 0
  %v128 = vsel %vm96, %v85, 0
  %v131 = vsel %vm96, %v86, 0
  %133 = vmatpush.bf16.msra.mxu0 0
  %134 = vmatpush.bf16.msra.mxu0 0
  %135 = vmatpush.bf16.msra.mxu0 0
  %136 = vmatpush.bf16.msra.mxu0 0
  %137 = vmatpush.bf16.msra.mxu0 0
  %138 = vmatpush.bf16.msra.mxu0 0
  %139 = vmatpush.bf16.msra.mxu0 0
  %140 = vmatpush.bf16.msra.mxu0 %v94
  %141 = vmatmul.bf16.gmra.mxu0 %v98
  %v142 = vpop.f32.mrf.mxu0
  %v143 = vadd.f32 0.0, %v142
  %v144 = vpop.f32.mrf.mxu0
  %v145 = vadd.f32 0.0, %v144
  %146 = vmatmul.bf16.gmra.mxu0 %v101
  %v147 = vpop.f32.mrf.mxu0
  %v148 = vadd.f32 0.0, %v147
  %v149 = vpop.f32.mrf.mxu0
  %v150 = vadd.f32 0.0, %v149
  %151 = vmatmul.bf16.gmra.mxu0 %v104
  %v152 = vpop.f32.mrf.mxu0
  %v153 = vadd.f32 0.0, %v152
  %v154 = vpop.f32.mrf.mxu0
  %v155 = vadd.f32 0.0, %v154
  %156 = vmatmul.bf16.gmra.mxu0 %v107
  %v157 = vpop.f32.mrf.mxu0
  %v158 = vadd.f32 0.0, %v157
  %v159 = vpop.f32.mrf.mxu0
  %v160 = vadd.f32 0.0, %v159
  %161 = vmatmul.bf16.gmra.mxu0 %v110
  %v162 = vpop.f32.mrf.mxu0
  %v163 = vadd.f32 0.0, %v162
  %v164 = vpop.f32.mrf.mxu0
  %v165 = vadd.f32 0.0, %v164
  %166 = vmatmul.bf16.gmra.mxu0 %v113
  %v167 = vpop.f32.mrf.mxu0
  %v168 = vadd.f32 0.0, %v167
  %v169 = vpop.f32.mrf.mxu0
  %v170 = vadd.f32 0.0, %v169
  %171 = vmatmul.bf16.gmra.mxu0 %v116
  %v172 = vpop.f32.mrf.mxu0
  %v173 = vadd.f32 0.0, %v172
  %v174 = vpop.f32.mrf.mxu0
  %v175 = vadd.f32 0.0, %v174
  %176 = vmatmul.bf16.gmra.mxu0 %v119
  %v177 = vpop.f32.mrf.mxu0
  %v178 = vadd.f32 0.0, %v177
  %v179 = vpop.f32.mrf.mxu0
  %v180 = vadd.f32 0.0, %v179
  %181 = vmatmul.bf16.gmra.mxu0 %v122
  %v182 = vpop.f32.mrf.mxu0
  %v183 = vadd.f32 0.0, %v182
  %v184 = vpop.f32.mrf.mxu0
  %v185 = vadd.f32 0.0, %v184
  %186 = vmatmul.bf16.gmra.mxu0 %v125
  %v187 = vpop.f32.mrf.mxu0
  %v188 = vadd.f32 0.0, %v187
  %v189 = vpop.f32.mrf.mxu0
  %v190 = vadd.f32 0.0, %v189
  %191 = vmatmul.bf16.gmra.mxu0 %v128
  %v192 = vpop.f32.mrf.mxu0
  %v193 = vadd.f32 0.0, %v192
  %v194 = vpop.f32.mrf.mxu0
  %v195 = vadd.f32 0.0, %v194
  %196 = vmatmul.bf16.gmra.mxu0 %v131
  %v197 = vpop.f32.mrf.mxu0
  %v198 = vadd.f32 0.0, %v197
  %v199 = vpop.f32.mrf.mxu0
  %200 = vdwg.mxu0
  %v203 = vunpack.c.l.b16 %v50
  %v204 = vunpack.c.l.b16 %v51
  %v205 = vpack.c.b16 %v204, %v203
  %v208 = vsel %vm96, %v38, 0
  %v211 = vsel %vm96, %v39, 0
  %v214 = vsel %vm96, %v40, 0
  %v217 = vsel %vm96, %v41, 0
  %v220 = vsel %vm96, %v42, 0
  %v223 = vsel %vm96, %v43, 0
  %v226 = vsel %vm96, %v44, 0
  %v229 = vsel %vm96, %v45, 0
  %v232 = vsel %vm96, %v46, 0
  %v235 = vsel %vm96, %v47, 0
  %v238 = vsel %vm96, %v48, 0
  %v241 = vsel %vm96, %v49, 0
  %243 = vmatpush.bf16.msra.mxu0 0
  %244 = vmatpush.bf16.msra.mxu0 0
  %245 = vmatpush.bf16.msra.mxu0 0
  %246 = vmatpush.bf16.msra.mxu0 0
  %247 = vmatpush.bf16.msra.mxu0 0
  %248 = vmatpush.bf16.msra.mxu0 0
  %249 = vmatpush.bf16.msra.mxu0 0
  %250 = vmatpush.bf16.msra.mxu0 %v205
  %251 = vmatmul.bf16.gmra.mxu0 %v208
  %v252 = vpop.f32.mrf.mxu0
  %v253 = vadd.f32 %v143, %v252
  %v254 = vpop.f32.mrf.mxu0
  %v255 = vadd.f32 %v145, %v254
  %256 = vmatmul.bf16.gmra.mxu0 %v211
  %v257 = vpop.f32.mrf.mxu0
  %v258 = vadd.f32 %v148, %v257
  %v259 = vpop.f32.mrf.mxu0
  %v260 = vadd.f32 %v150, %v259
  %261 = vmatmul.bf16.gmra.mxu0 %v214
  %v262 = vpop.f32.mrf.mxu0
  %v263 = vadd.f32 %v153, %v262
  %v264 = vpop.f32.mrf.mxu0
  %v265 = vadd.f32 %v155, %v264
  %266 = vmatmul.bf16.gmra.mxu0 %v217
  %v267 = vpop.f32.mrf.mxu0
  %v268 = vadd.f32 %v158, %v267
  %v269 = vpop.f32.mrf.mxu0
  %v270 = vadd.f32 %v160, %v269
  %271 = vmatmul.bf16.gmra.mxu0 %v220
  %v272 = vpop.f32.mrf.mxu0
  %v273 = vadd.f32 %v163, %v272
  %v274 = vpop.f32.mrf.mxu0
  %v275 = vadd.f32 %v165, %v274
  %276 = vmatmul.bf16.gmra.mxu0 %v223
  %v277 = vpop.f32.mrf.mxu0
  %v278 = vadd.f32 %v168, %v277
  %v279 = vpop.f32.mrf.mxu0
  %v280 = vadd.f32 %v170, %v279
  %281 = vmatmul.bf16.gmra.mxu0 %v226
  %v282 = vpop.f32.mrf.mxu0
  %v283 = vadd.f32 %v173, %v282
  %v284 = vpop.f32.mrf.mxu0
  %v285 = vadd.f32 %v175, %v284
  %286 = vmatmul.bf16.gmra.mxu0 %v229
  %v287 = vpop.f32.mrf.mxu0
  %v288 = vadd.f32 %v178, %v287
  %v289 = vpop.f32.mrf.mxu0
  %v290 = vadd.f32 %v180, %v289
  %291 = vmatmul.bf16.gmra.mxu0 %v232
  %v292 = vpop.f32.mrf.mxu0
  %v293 = vadd.f32 %v183, %v292
  %v294 = vpop.f32.mrf.mxu0
  %v295 = vadd.f32 %v185, %v294
  %296 = vmatmul.bf16.gmra.mxu0 %v235
  %v297 = vpop.f32.mrf.mxu0
  %v298 = vadd.f32 %v188, %v297
  %v299 = vpop.f32.mrf.mxu0
  %v300 = vadd.f32 %v190, %v299
  %301 = vmatmul.bf16.gmra.mxu0 %v238
  %v302 = vpop.f32.mrf.mxu0
  %v303 = vadd.f32 %v193, %v302
  %v304 = vpop.f32.mrf.mxu0
  %v305 = vadd.f32 %v195, %v304
  %306 = vmatmul.bf16.gmra.mxu0 %v241
  %v307 = vpop.f32.mrf.mxu0
  %v308 = vadd.f32 %v198, %v307
  %v309 = vpop.f32.mrf.mxu0
  %310 = vdwg.mxu0
  %v311 = vld [vmem:[%s0 + $0x2] sm:$0xff]
  %v312 = vld [vmem:[%s0 + $0xa] sm:$0xff]
  %v313 = vld [vmem:[%s0 + $0x12] sm:$0xff]
  %v314 = vld [vmem:[%s0 + $0x1a] sm:$0xff]
  %v315 = vld [vmem:[%s0 + $0x22] sm:$0xff]
  %v316 = vld [vmem:[%s0 + $0x2a] sm:$0xff]
  %v317 = vld [vmem:[%s0 + $0x32] sm:$0xff]
  %v318 = vld [vmem:[%s0 + $0x3a] sm:$0xff]
  %v319 = vld [vmem:[%s0 + $0x42] sm:$0xff]
  %v320 = vld [vmem:[%s0 + $0x4a] sm:$0xff]
  %v321 = vld [vmem:[%s0 + $0x52] sm:$0xff]
  %v322 = vld [vmem:[%s0 + $0x5a] sm:$0xff]
  %v323 = vld [vmem:[%s0 + $0x62] sm:$0xff]
  %v324 = vld [vmem:[%s0 + $0x6a] sm:$0xff]
  %v325 = vld [vmem:[%s0 + $0x72] sm:$0xff]
  %v326 = vld [vmem:[%s0 + $0x7a] sm:$0xff]
  %v327 = vld [vmem:[%s0 + $0x82] sm:$0xff]
  %v328 = vld [vmem:[%s0 + $0x8a] sm:$0xff]
  %v329 = vld [vmem:[%s0 + $0x92] sm:$0xff]
  %v330 = vld [vmem:[%s0 + $0x9a] sm:$0xff]
  %v331 = vld [vmem:[%s0 + $0xa2] sm:$0xff]
  %v332 = vld [vmem:[%s0 + $0xaa] sm:$0xff]
  %v333 = vld [vmem:[%s0 + $0xb2] sm:$0xf]
  %v334 = vpack.c.bf16 %v312, %v311
  %v335 = vpack.c.bf16 %v314, %v313
  %v336 = vpack.c.bf16 %v316, %v315
  %v337 = vpack.c.bf16 %v318, %v317
  %v338 = vpack.c.bf16 %v320, %v319
  %v339 = vpack.c.bf16 %v322, %v321
  %v340 = vpack.c.bf16 %v324, %v323
  %v341 = vpack.c.bf16 %v326, %v325
  %v342 = vpack.c.bf16 %v328, %v327
  %v343 = vpack.c.bf16 %v330, %v329
  %v344 = vpack.c.bf16 %v332, %v331
  %v345 = vpack.c.bf16 %v333, %v333
  %s346 = scalar_lea.vmem %s1, 16
  %v347 = vld [vmem:[%s346] sm:$0xf]
  %v348 = vld [vmem:[%s346 + $0x4] sm:$0xf]
  %v351 = vunpack.c.l.b16 %v347
  %v352 = vunpack.c.l.b16 %v348
  %v353 = vpack.c.b16 %v352, %v351
  %v356 = vsel %vm96, %v334, 0
  %v359 = vsel %vm96, %v335, 0
  %v362 = vsel %vm96, %v336, 0
  %v365 = vsel %vm96, %v337, 0
  %v368 = vsel %vm96, %v338, 0
  %v371 = vsel %vm96, %v339, 0
  %v374 = vsel %vm96, %v340, 0
  %v377 = vsel %vm96, %v341, 0
  %v380 = vsel %vm96, %v342, 0
  %v383 = vsel %vm96, %v343, 0
  %v386 = vsel %vm96, %v344, 0
  %v389 = vsel %vm96, %v345, 0
  %391 = vmatpush.bf16.msra.mxu0 0
  %392 = vmatpush.bf16.msra.mxu0 0
  %393 = vmatpush.bf16.msra.mxu0 0
  %394 = vmatpush.bf16.msra.mxu0 0
  %395 = vmatpush.bf16.msra.mxu0 0
  %396 = vmatpush.bf16.msra.mxu0 0
  %397 = vmatpush.bf16.msra.mxu0 0
  %398 = vmatpush.bf16.msra.mxu0 %v353
  %399 = vmatmul.bf16.gmra.mxu0 %v356
  %v400 = vpop.f32.mrf.mxu0
  %v401 = vadd.f32 0.0, %v400
  %v402 = vpop.f32.mrf.mxu0
  %v403 = vadd.f32 0.0, %v402
  %404 = vmatmul.bf16.gmra.mxu0 %v359
  %v405 = vpop.f32.mrf.mxu0
  %v406 = vadd.f32 0.0, %v405
  %v407 = vpop.f32.mrf.mxu0
  %v408 = vadd.f32 0.0, %v407
  %409 = vmatmul.bf16.gmra.mxu0 %v362
  %v410 = vpop.f32.mrf.mxu0
  %v411 = vadd.f32 0.0, %v410
  %v412 = vpop.f32.mrf.mxu0
  %v413 = vadd.f32 0.0, %v412
  %414 = vmatmul.bf16.gmra.mxu0 %v365
  %v415 = vpop.f32.mrf.mxu0
  %v416 = vadd.f32 0.0, %v415
  %v417 = vpop.f32.mrf.mxu0
  %v418 = vadd.f32 0.0, %v417
  %419 = vmatmul.bf16.gmra.mxu0 %v368
  %v420 = vpop.f32.mrf.mxu0
  %v421 = vadd.f32 0.0, %v420
  %v422 = vpop.f32.mrf.mxu0
  %v423 = vadd.f32 0.0, %v422
  %424 = vmatmul.bf16.gmra.mxu0 %v371
  %v425 = vpop.f32.mrf.mxu0
  %v426 = vadd.f32 0.0, %v425
  %v427 = vpop.f32.mrf.mxu0
  %v428 = vadd.f32 0.0, %v427
  %429 = vmatmul.bf16.gmra.mxu0 %v374
  %v430 = vpop.f32.mrf.mxu0
  %v431 = vadd.f32 0.0, %v430
  %v432 = vpop.f32.mrf.mxu0
  %v433 = vadd.f32 0.0, %v432
  %434 = vmatmul.bf16.gmra.mxu0 %v377
  %v435 = vpop.f32.mrf.mxu0
  %v436 = vadd.f32 0.0, %v435
  %v437 = vpop.f32.mrf.mxu0
  %v438 = vadd.f32 0.0, %v437
  %439 = vmatmul.bf16.gmra.mxu0 %v380
  %v440 = vpop.f32.mrf.mxu0
  %v441 = vadd.f32 0.0, %v440
  %v442 = vpop.f32.mrf.mxu0
  %v443 = vadd.f32 0.0, %v442
  %444 = vmatmul.bf16.gmra.mxu0 %v383
  %v445 = vpop.f32.mrf.mxu0
  %v446 = vadd.f32 0.0, %v445
  %v447 = vpop.f32.mrf.mxu0
  %v448 = vadd.f32 0.0, %v447
  %449 = vmatmul.bf16.gmra.mxu0 %v386
  %v450 = vpop.f32.mrf.mxu0
  %v451 = vadd.f32 0.0, %v450
  %v452 = vpop.f32.mrf.mxu0
  %v453 = vadd.f32 0.0, %v452
  %454 = vmatmul.bf16.gmra.mxu0 %v389
  %v455 = vpop.f32.mrf.mxu0
  %v456 = vadd.f32 0.0, %v455
  %v457 = vpop.f32.mrf.mxu0
  %458 = vdwg.mxu0
  %v459 = vadd.f32 %v253, %v401
  %v460 = vadd.f32 %v255, %v403
  %v461 = vadd.f32 %v258, %v406
  %v462 = vadd.f32 %v260, %v408
  %v463 = vadd.f32 %v263, %v411
  %v464 = vadd.f32 %v265, %v413
  %v465 = vadd.f32 %v268, %v416
  %v466 = vadd.f32 %v270, %v418
  %v467 = vadd.f32 %v273, %v421
  %v468 = vadd.f32 %v275, %v423
  %v469 = vadd.f32 %v278, %v426
  %v470 = vadd.f32 %v280, %v428
  %v471 = vadd.f32 %v283, %v431
  %v472 = vadd.f32 %v285, %v433
  %v473 = vadd.f32 %v288, %v436
  %v474 = vadd.f32 %v290, %v438
  %v475 = vadd.f32 %v293, %v441
  %v476 = vadd.f32 %v295, %v443
  %v477 = vadd.f32 %v298, %v446
  %v478 = vadd.f32 %v300, %v448
  %v479 = vadd.f32 %v303, %v451
  %v480 = vadd.f32 %v305, %v453
  %v481 = vadd.f32 %v308, %v456
  %v482 = vld [vmem:[%s0 + $0xa] sm:$0xff]
  %v483 = vld [vmem:[%s0 + $0x12] sm:$0xff]
  %v484 = vld [vmem:[%s0 + $0x1a] sm:$0xff]
  %v485 = vld [vmem:[%s0 + $0x22] sm:$0xff]
  %v486 = vld [vmem:[%s0 + $0x2a] sm:$0xff]
  %v487 = vld [vmem:[%s0 + $0x32] sm:$0xff]
  %v488 = vld [vmem:[%s0 + $0x3a] sm:$0xff]
  %v489 = vld [vmem:[%s0 + $0x42] sm:$0xff]
  %v490 = vld [vmem:[%s0 + $0x4a] sm:$0xff]
  %v491 = vld [vmem:[%s0 + $0x52] sm:$0xff]
  %v492 = vld [vmem:[%s0 + $0x5a] sm:$0xff]
  %v493 = vld [vmem:[%s0 + $0x62] sm:$0xff]
  %v494 = vld [vmem:[%s0 + $0x6a] sm:$0xff]
  %v495 = vld [vmem:[%s0 + $0x72] sm:$0xff]
  %v496 = vld [vmem:[%s0 + $0x7a] sm:$0xff]
  %v497 = vld [vmem:[%s0 + $0x82] sm:$0xff]
  %v498 = vld [vmem:[%s0 + $0x8a] sm:$0xff]
  %v499 = vld [vmem:[%s0 + $0x92] sm:$0xff]
  %v500 = vld [vmem:[%s0 + $0x9a] sm:$0xff]
  %v501 = vld [vmem:[%s0 + $0xa2] sm:$0xff]
  %v502 = vld [vmem:[%s0 + $0xaa] sm:$0xff]
  %v503 = vld [vmem:[%s0 + $0xb2] sm:$0xff]
  %v504 = vld [vmem:[%s0 + $0xba] sm:$0xf]
  %v505 = vpack.c.bf16 %v483, %v482
  %v506 = vpack.c.bf16 %v485, %v484
  %v507 = vpack.c.bf16 %v487, %v486
  %v508 = vpack.c.bf16 %v489, %v488
  %v509 = vpack.c.bf16 %v491, %v490
  %v510 = vpack.c.bf16 %v493, %v492
  %v511 = vpack.c.bf16 %v495, %v494
  %v512 = vpack.c.bf16 %v497, %v496
  %v513 = vpack.c.bf16 %v499, %v498
  %v514 = vpack.c.bf16 %v501, %v500
  %v515 = vpack.c.bf16 %v503, %v502
  %v516 = vpack.c.bf16 %v504, %v504
  %s517 = scalar_lea.vmem %s1, 24
  %v518 = vld [vmem:[%s517] sm:$0xf]
  %v519 = vld [vmem:[%s517 + $0x4] sm:$0xf]
  %v522 = vunpack.c.l.b16 %v518
  %v523 = vunpack.c.l.b16 %v519
  %v524 = vpack.c.b16 %v523, %v522
  %v527 = vsel %vm96, %v505, 0
  %v530 = vsel %vm96, %v506, 0
  %v533 = vsel %vm96, %v507, 0
  %v536 = vsel %vm96, %v508, 0
  %v539 = vsel %vm96, %v509, 0
  %v542 = vsel %vm96, %v510, 0
  %v545 = vsel %vm96, %v511, 0
  %v548 = vsel %vm96, %v512, 0
  %v551 = vsel %vm96, %v513, 0
  %v554 = vsel %vm96, %v514, 0
  %v557 = vsel %vm96, %v515, 0
  %v560 = vsel %vm96, %v516, 0
  %562 = vmatpush.bf16.msra.mxu0 0
  %563 = vmatpush.bf16.msra.mxu0 0
  %564 = vmatpush.bf16.msra.mxu0 0
  %565 = vmatpush.bf16.msra.mxu0 0
  %566 = vmatpush.bf16.msra.mxu0 0
  %567 = vmatpush.bf16.msra.mxu0 0
  %568 = vmatpush.bf16.msra.mxu0 0
  %569 = vmatpush.bf16.msra.mxu0 %v524
  %570 = vmatmul.bf16.gmra.mxu0 %v527
  %v571 = vpop.f32.mrf.mxu0
  %v572 = vadd.f32 0.0, %v571
  %v573 = vpop.f32.mrf.mxu0
  %v574 = vadd.f32 0.0, %v573
  %575 = vmatmul.bf16.gmra.mxu0 %v530
  %v576 = vpop.f32.mrf.mxu0
  %v577 = vadd.f32 0.0, %v576
  %v578 = vpop.f32.mrf.mxu0
  %v579 = vadd.f32 0.0, %v578
  %580 = vmatmul.bf16.gmra.mxu0 %v533
  %v581 = vpop.f32.mrf.mxu0
  %v582 = vadd.f32 0.0, %v581
  %v583 = vpop.f32.mrf.mxu0
  %v584 = vadd.f32 0.0, %v583
  %585 = vmatmul.bf16.gmra.mxu0 %v536
  %v586 = vpop.f32.mrf.mxu0
  %v587 = vadd.f32 0.0, %v586
  %v588 = vpop.f32.mrf.mxu0
  %v589 = vadd.f32 0.0, %v588
  %590 = vmatmul.bf16.gmra.mxu0 %v539
  %v591 = vpop.f32.mrf.mxu0
  %v592 = vadd.f32 0.0, %v591
  %v593 = vpop.f32.mrf.mxu0
  %v594 = vadd.f32 0.0, %v593
  %595 = vmatmul.bf16.gmra.mxu0 %v542
  %v596 = vpop.f32.mrf.mxu0
  %v597 = vadd.f32 0.0, %v596
  %v598 = vpop.f32.mrf.mxu0
  %v599 = vadd.f32 0.0, %v598
  %600 = vmatmul.bf16.gmra.mxu0 %v545
  %v601 = vpop.f32.mrf.mxu0
  %v602 = vadd.f32 0.0, %v601
  %v603 = vpop.f32.mrf.mxu0
  %v604 = vadd.f32 0.0, %v603
  %605 = vmatmul.bf16.gmra.mxu0 %v548
  %v606 = vpop.f32.mrf.mxu0
  %v607 = vadd.f32 0.0, %v606
  %v608 = vpop.f32.mrf.mxu0
  %v609 = vadd.f32 0.0, %v608
  %610 = vmatmul.bf16.gmra.mxu0 %v551
  %v611 = vpop.f32.mrf.mxu0
  %v612 = vadd.f32 0.0, %v611
  %v613 = vpop.f32.mrf.mxu0
  %v614 = vadd.f32 0.0, %v613
  %615 = vmatmul.bf16.gmra.mxu0 %v554
  %v616 = vpop.f32.mrf.mxu0
  %v617 = vadd.f32 0.0, %v616
  %v618 = vpop.f32.mrf.mxu0
  %v619 = vadd.f32 0.0, %v618
  %620 = vmatmul.bf16.gmra.mxu0 %v557
  %v621 = vpop.f32.mrf.mxu0
  %v622 = vadd.f32 0.0, %v621
  %v623 = vpop.f32.mrf.mxu0
  %v624 = vadd.f32 0.0, %v623
  %625 = vmatmul.bf16.gmra.mxu0 %v560
  %v626 = vpop.f32.mrf.mxu0
  %v627 = vadd.f32 0.0, %v626
  %v628 = vpop.f32.mrf.mxu0
  %629 = vdwg.mxu0
  %v630 = vadd.f32 %v459, %v572
  %v631 = vadd.f32 %v460, %v574
  %v632 = vadd.f32 %v461, %v577
  %v633 = vadd.f32 %v462, %v579
  %v634 = vadd.f32 %v463, %v582
  %v635 = vadd.f32 %v464, %v584
  %v636 = vadd.f32 %v465, %v587
  %v637 = vadd.f32 %v466, %v589
  %v638 = vadd.f32 %v467, %v592
  %v639 = vadd.f32 %v468, %v594
  %v640 = vadd.f32 %v469, %v597
  %v641 = vadd.f32 %v470, %v599
  %v642 = vadd.f32 %v471, %v602
  %v643 = vadd.f32 %v472, %v604
  %v644 = vadd.f32 %v473, %v607
  %v645 = vadd.f32 %v474, %v609
  %v646 = vadd.f32 %v475, %v612
  %v647 = vadd.f32 %v476, %v614
  %v648 = vadd.f32 %v477, %v617
  %v649 = vadd.f32 %v478, %v619
  %v650 = vadd.f32 %v479, %v622
  %v651 = vadd.f32 %v480, %v624
  %v652 = vadd.f32 %v481, %v627
  %v653 = vld [vmem:[%s0 + $0xb] sm:$0xff]
  %v654 = vld [vmem:[%s0 + $0x13] sm:$0xff]
  %v655 = vld [vmem:[%s0 + $0x1b] sm:$0xff]
  %v656 = vld [vmem:[%s0 + $0x23] sm:$0xff]
  %v657 = vld [vmem:[%s0 + $0x2b] sm:$0xff]
  %v658 = vld [vmem:[%s0 + $0x33] sm:$0xff]
  %v659 = vld [vmem:[%s0 + $0x3b] sm:$0xff]
  %v660 = vld [vmem:[%s0 + $0x43] sm:$0xff]
  %v661 = vld [vmem:[%s0 + $0x4b] sm:$0xff]
  %v662 = vld [vmem:[%s0 + $0x53] sm:$0xff]
  %v663 = vld [vmem:[%s0 + $0x5b] sm:$0xff]
  %v664 = vld [vmem:[%s0 + $0x63] sm:$0xff]
  %v665 = vld [vmem:[%s0 + $0x6b] sm:$0xff]
  %v666 = vld [vmem:[%s0 + $0x73] sm:$0xff]
  %v667 = vld [vmem:[%s0 + $0x7b] sm:$0xff]
  %v668 = vld [vmem:[%s0 + $0x83] sm:$0xff]
  %v669 = vld [vmem:[%s0 + $0x8b] sm:$0xff]
  %v670 = vld [vmem:[%s0 + $0x93] sm:$0xff]
  %v671 = vld [vmem:[%s0 + $0x9b] sm:$0xff]
  %v672 = vld [vmem:[%s0 + $0xa3] sm:$0xff]
  %v673 = vld [vmem:[%s0 + $0xab] sm:$0xff]
  %v674 = vld [vmem:[%s0 + $0xb3] sm:$0xff]
  %v675 = vld [vmem:[%s0 + $0xbb] sm:$0xf]
  %v676 = vpack.c.bf16 %v654, %v653
  %v677 = vpack.c.bf16 %v656, %v655
  %v678 = vpack.c.bf16 %v658, %v657
  %v679 = vpack.c.bf16 %v660, %v659
  %v680 = vpack.c.bf16 %v662, %v661
  %v681 = vpack.c.bf16 %v664, %v663
  %v682 = vpack.c.bf16 %v666, %v665
  %v683 = vpack.c.bf16 %v668, %v667
  %v684 = vpack.c.bf16 %v670, %v669
  %v685 = vpack.c.bf16 %v672, %v671
  %v686 = vpack.c.bf16 %v674, %v673
  %v687 = vpack.c.bf16 %v675, %v675
  %s688 = scalar_lea.vmem %s1, 32
  %v689 = vld [vmem:[%s688] sm:$0xf]
  %v690 = vld [vmem:[%s688 + $0x4] sm:$0xf]
  %v693 = vunpack.c.l.b16 %v689
  %v694 = vunpack.c.l.b16 %v690
  %v695 = vpack.c.b16 %v694, %v693
  %v698 = vsel %vm96, %v676, 0
  %v701 = vsel %vm96, %v677, 0
  %v704 = vsel %vm96, %v678, 0
  %v707 = vsel %vm96, %v679, 0
  %v710 = vsel %vm96, %v680, 0
  %v713 = vsel %vm96, %v681, 0
  %v716 = vsel %vm96, %v682, 0
  %v719 = vsel %vm96, %v683, 0
  %v722 = vsel %vm96, %v684, 0
  %v725 = vsel %vm96, %v685, 0
  %v728 = vsel %vm96, %v686, 0
  %v731 = vsel %vm96, %v687, 0
  %733 = vmatpush.bf16.msra.mxu0 0
  %734 = vmatpush.bf16.msra.mxu0 0
  %735 = vmatpush.bf16.msra.mxu0 0
  %736 = vmatpush.bf16.msra.mxu0 0
  %737 = vmatpush.bf16.msra.mxu0 0
  %738 = vmatpush.bf16.msra.mxu0 0
  %739 = vmatpush.bf16.msra.mxu0 0
  %740 = vmatpush.bf16.msra.mxu0 %v695
  %741 = vmatmul.bf16.gmra.mxu0 %v698
  %v742 = vpop.f32.mrf.mxu0
  %v743 = vadd.f32 0.0, %v742
  %v744 = vpop.f32.mrf.mxu0
  %v745 = vadd.f32 0.0, %v744
  %746 = vmatmul.bf16.gmra.mxu0 %v701
  %v747 = vpop.f32.mrf.mxu0
  %v748 = vadd.f32 0.0, %v747
  %v749 = vpop.f32.mrf.mxu0
  %v750 = vadd.f32 0.0, %v749
  %751 = vmatmul.bf16.gmra.mxu0 %v704
  %v752 = vpop.f32.mrf.mxu0
  %v753 = vadd.f32 0.0, %v752
  %v754 = vpop.f32.mrf.mxu0
  %v755 = vadd.f32 0.0, %v754
  %756 = vmatmul.bf16.gmra.mxu0 %v707
  %v757 = vpop.f32.mrf.mxu0
  %v758 = vadd.f32 0.0, %v757
  %v759 = vpop.f32.mrf.mxu0
  %v760 = vadd.f32 0.0, %v759
  %761 = vmatmul.bf16.gmra.mxu0 %v710
  %v762 = vpop.f32.mrf.mxu0
  %v763 = vadd.f32 0.0, %v762
  %v764 = vpop.f32.mrf.mxu0
  %v765 = vadd.f32 0.0, %v764
  %766 = vmatmul.bf16.gmra.mxu0 %v713
  %v767 = vpop.f32.mrf.mxu0
  %v768 = vadd.f32 0.0, %v767
  %v769 = vpop.f32.mrf.mxu0
  %v770 = vadd.f32 0.0, %v769
  %771 = vmatmul.bf16.gmra.mxu0 %v716
  %v772 = vpop.f32.mrf.mxu0
  %v773 = vadd.f32 0.0, %v772
  %v774 = vpop.f32.mrf.mxu0
  %v775 = vadd.f32 0.0, %v774
  %776 = vmatmul.bf16.gmra.mxu0 %v719
  %v777 = vpop.f32.mrf.mxu0
  %v778 = vadd.f32 0.0, %v777
  %v779 = vpop.f32.mrf.mxu0
  %v780 = vadd.f32 0.0, %v779
  %781 = vmatmul.bf16.gmra.mxu0 %v722
  %v782 = vpop.f32.mrf.mxu0
  %v783 = vadd.f32 0.0, %v782
  %v784 = vpop.f32.mrf.mxu0
  %v785 = vadd.f32 0.0, %v784
  %786 = vmatmul.bf16.gmra.mxu0 %v725
  %v787 = vpop.f32.mrf.mxu0
  %v788 = vadd.f32 0.0, %v787
  %v789 = vpop.f32.mrf.mxu0
  %v790 = vadd.f32 0.0, %v789
  %791 = vmatmul.bf16.gmra.mxu0 %v728
  %v792 = vpop.f32.mrf.mxu0
  %v793 = vadd.f32 0.0, %v792
  %v794 = vpop.f32.mrf.mxu0
  %v795 = vadd.f32 0.0, %v794
  %796 = vmatmul.bf16.gmra.mxu0 %v731
  %v797 = vpop.f32.mrf.mxu0
  %v798 = vadd.f32 0.0, %v797
  %v799 = vpop.f32.mrf.mxu0
  %800 = vdwg.mxu0
  %v801 = vadd.f32 %v630, %v743
  %v802 = vadd.f32 %v631, %v745
  %v803 = vadd.f32 %v632, %v748
  %v804 = vadd.f32 %v633, %v750
  %v805 = vadd.f32 %v634, %v753
  %v806 = vadd.f32 %v635, %v755
  %v807 = vadd.f32 %v636, %v758
  %v808 = vadd.f32 %v637, %v760
  %v809 = vadd.f32 %v638, %v763
  %v810 = vadd.f32 %v639, %v765
  %v811 = vadd.f32 %v640, %v768
  %v812 = vadd.f32 %v641, %v770
  %v813 = vadd.f32 %v642, %v773
  %v814 = vadd.f32 %v643, %v775
  %v815 = vadd.f32 %v644, %v778
  %v816 = vadd.f32 %v645, %v780
  %v817 = vadd.f32 %v646, %v783
  %v818 = vadd.f32 %v647, %v785
  %v819 = vadd.f32 %v648, %v788
  %v820 = vadd.f32 %v649, %v790
  %v821 = vadd.f32 %v650, %v793
  %v822 = vadd.f32 %v651, %v795
  %v823 = vadd.f32 %v652, %v798
  %v824 = vld [vmem:[%s0 + $0xc] sm:$0xff]
  %v825 = vld [vmem:[%s0 + $0x14] sm:$0xff]
  %v826 = vld [vmem:[%s0 + $0x1c] sm:$0xff]
  %v827 = vld [vmem:[%s0 + $0x24] sm:$0xff]
  %v828 = vld [vmem:[%s0 + $0x2c] sm:$0xff]
  %v829 = vld [vmem:[%s0 + $0x34] sm:$0xff]
  %v830 = vld [vmem:[%s0 + $0x3c] sm:$0xff]
  %v831 = vld [vmem:[%s0 + $0x44] sm:$0xff]
  %v832 = vld [vmem:[%s0 + $0x4c] sm:$0xff]
  %v833 = vld [vmem:[%s0 + $0x54] sm:$0xff]
  %v834 = vld [vmem:[%s0 + $0x5c] sm:$0xff]
  %v835 = vld [vmem:[%s0 + $0x64] sm:$0xff]
  %v836 = vld [vmem:[%s0 + $0x6c] sm:$0xff]
  %v837 = vld [vmem:[%s0 + $0x74] sm:$0xff]
  %v838 = vld [vmem:[%s0 + $0x7c] sm:$0xff]
  %v839 = vld [vmem:[%s0 + $0x84] sm:$0xff]
  %v840 = vld [vmem:[%s0 + $0x8c] sm:$0xff]
  %v841 = vld [vmem:[%s0 + $0x94] sm:$0xff]
  %v842 = vld [vmem:[%s0 + $0x9c] sm:$0xff]
  %v843 = vld [vmem:[%s0 + $0xa4] sm:$0xff]
  %v844 = vld [vmem:[%s0 + $0xac] sm:$0xff]
  %v845 = vld [vmem:[%s0 + $0xb4] sm:$0xff]
  %v846 = vld [vmem:[%s0 + $0xbc] sm:$0xf]
  %v847 = vpack.c.bf16 %v825, %v824
  %v848 = vpack.c.bf16 %v827, %v826
  %v849 = vpack.c.bf16 %v829, %v828
  %v850 = vpack.c.bf16 %v831, %v830
  %v851 = vpack.c.bf16 %v833, %v832
  %v852 = vpack.c.bf16 %v835, %v834
  %v853 = vpack.c.bf16 %v837, %v836
  %v854 = vpack.c.bf16 %v839, %v838
  %v855 = vpack.c.bf16 %v841, %v840
  %v856 = vpack.c.bf16 %v843, %v842
  %v857 = vpack.c.bf16 %v845, %v844
  %v858 = vpack.c.bf16 %v846, %v846
  %s859 = scalar_lea.vmem %s1, 40
  %v860 = vld [vmem:[%s859] sm:$0xf]
  %v861 = vld [vmem:[%s859 + $0x4] sm:$0xf]
  %v864 = vunpack.c.l.b16 %v860
  %v865 = vunpack.c.l.b16 %v861
  %v866 = vpack.c.b16 %v865, %v864
  %v869 = vsel %vm96, %v847, 0
  %v872 = vsel %vm96, %v848, 0
  %v875 = vsel %vm96, %v849, 0
  %v878 = vsel %vm96, %v850, 0
  %v881 = vsel %vm96, %v851, 0
  %v884 = vsel %vm96, %v852, 0
  %v887 = vsel %vm96, %v853, 0
  %v890 = vsel %vm96, %v854, 0
  %v893 = vsel %vm96, %v855, 0
  %v896 = vsel %vm96, %v856, 0
  %v899 = vsel %vm96, %v857, 0
  %v902 = vsel %vm96, %v858, 0
  %904 = vmatpush.bf16.msra.mxu0 0
  %905 = vmatpush.bf16.msra.mxu0 0
  %906 = vmatpush.bf16.msra.mxu0 0
  %907 = vmatpush.bf16.msra.mxu0 0
  %908 = vmatpush.bf16.msra.mxu0 0
  %909 = vmatpush.bf16.msra.mxu0 0
  %910 = vmatpush.bf16.msra.mxu0 0
  %911 = vmatpush.bf16.msra.mxu0 %v866
  %912 = vmatmul.bf16.gmra.mxu0 %v869
  %v913 = vpop.f32.mrf.mxu0
  %v914 = vadd.f32 0.0, %v913
  %v915 = vpop.f32.mrf.mxu0
  %v916 = vadd.f32 0.0, %v915
  %917 = vmatmul.bf16.gmra.mxu0 %v872
  %v918 = vpop.f32.mrf.mxu0
  %v919 = vadd.f32 0.0, %v918
  %v920 = vpop.f32.mrf.mxu0
  %v921 = vadd.f32 0.0, %v920
  %922 = vmatmul.bf16.gmra.mxu0 %v875
  %v923 = vpop.f32.mrf.mxu0
  %v924 = vadd.f32 0.0, %v923
  %v925 = vpop.f32.mrf.mxu0
  %v926 = vadd.f32 0.0, %v925
  %927 = vmatmul.bf16.gmra.mxu0 %v878
  %v928 = vpop.f32.mrf.mxu0
  %v929 = vadd.f32 0.0, %v928
  %v930 = vpop.f32.mrf.mxu0
  %v931 = vadd.f32 0.0, %v930
  %932 = vmatmul.bf16.gmra.mxu0 %v881
  %v933 = vpop.f32.mrf.mxu0
  %v934 = vadd.f32 0.0, %v933
  %v935 = vpop.f32.mrf.mxu0
  %v936 = vadd.f32 0.0, %v935
  %937 = vmatmul.bf16.gmra.mxu0 %v884
  %v938 = vpop.f32.mrf.mxu0
  %v939 = vadd.f32 0.0, %v938
  %v940 = vpop.f32.mrf.mxu0
  %v941 = vadd.f32 0.0, %v940
  %942 = vmatmul.bf16.gmra.mxu0 %v887
  %v943 = vpop.f32.mrf.mxu0
  %v944 = vadd.f32 0.0, %v943
  %v945 = vpop.f32.mrf.mxu0
  %v946 = vadd.f32 0.0, %v945
  %947 = vmatmul.bf16.gmra.mxu0 %v890
  %v948 = vpop.f32.mrf.mxu0
  %v949 = vadd.f32 0.0, %v948
  %v950 = vpop.f32.mrf.mxu0
  %v951 = vadd.f32 0.0, %v950
  %952 = vmatmul.bf16.gmra.mxu0 %v893
  %v953 = vpop.f32.mrf.mxu0
  %v954 = vadd.f32 0.0, %v953
  %v955 = vpop.f32.mrf.mxu0
  %v956 = vadd.f32 0.0, %v955
  %957 = vmatmul.bf16.gmra.mxu0 %v896
  %v958 = vpop.f32.mrf.mxu0
  %v959 = vadd.f32 0.0, %v958
  %v960 = vpop.f32.mrf.mxu0
  %v961 = vadd.f32 0.0, %v960
  %962 = vmatmul.bf16.gmra.mxu0 %v899
  %v963 = vpop.f32.mrf.mxu0
  %v964 = vadd.f32 0.0, %v963
  %v965 = vpop.f32.mrf.mxu0
  %v966 = vadd.f32 0.0, %v965
  %967 = vmatmul.bf16.gmra.mxu0 %v902
  %v968 = vpop.f32.mrf.mxu0
  %v969 = vadd.f32 0.0, %v968
  %v970 = vpop.f32.mrf.mxu0
  %971 = vdwg.mxu0
  %v972 = vadd.f32 %v801, %v914
  %v973 = vadd.f32 %v802, %v916
  %v974 = vadd.f32 %v803, %v919
  %v975 = vadd.f32 %v804, %v921
  %v976 = vadd.f32 %v805, %v924
  %v977 = vadd.f32 %v806, %v926
  %v978 = vadd.f32 %v807, %v929
  %v979 = vadd.f32 %v808, %v931
  %v980 = vadd.f32 %v809, %v934
  %v981 = vadd.f32 %v810, %v936
  %v982 = vadd.f32 %v811, %v939
  %v983 = vadd.f32 %v812, %v941
  %v984 = vadd.f32 %v813, %v944
  %v985 = vadd.f32 %v814, %v946
  %v986 = vadd.f32 %v815, %v949
  %v987 = vadd.f32 %v816, %v951
  %v988 = vadd.f32 %v817, %v954
  %v989 = vadd.f32 %v818, %v956
  %v990 = vadd.f32 %v819, %v959
  %v991 = vadd.f32 %v820, %v961
  %v992 = vadd.f32 %v821, %v964
  %v993 = vadd.f32 %v822, %v966
  %v994 = vadd.f32 %v823, %v969
  %v995 = vld [vmem:[%s0 + $0x14] sm:$0xff]
  %v996 = vld [vmem:[%s0 + $0x1c] sm:$0xff]
  %v997 = vld [vmem:[%s0 + $0x24] sm:$0xff]
  %v998 = vld [vmem:[%s0 + $0x2c] sm:$0xff]
  %v999 = vld [vmem:[%s0 + $0x34] sm:$0xff]
  %v1000 = vld [vmem:[%s0 + $0x3c] sm:$0xff]
  %v1001 = vld [vmem:[%s0 + $0x44] sm:$0xff]
  %v1002 = vld [vmem:[%s0 + $0x4c] sm:$0xff]
  %v1003 = vld [vmem:[%s0 + $0x54] sm:$0xff]
  %v1004 = vld [vmem:[%s0 + $0x5c] sm:$0xff]
  %v1005 = vld [vmem:[%s0 + $0x64] sm:$0xff]
  %v1006 = vld [vmem:[%s0 + $0x6c] sm:$0xff]
  %v1007 = vld [vmem:[%s0 + $0x74] sm:$0xff]
  %v1008 = vld [vmem:[%s0 + $0x7c] sm:$0xff]
  %v1009 = vld [vmem:[%s0 + $0x84] sm:$0xff]
  %v1010 = vld [vmem:[%s0 + $0x8c] sm:$0xff]
  %v1011 = vld [vmem:[%s0 + $0x94] sm:$0xff]
  %v1012 = vld [vmem:[%s0 + $0x9c] sm:$0xff]
  %v1013 = vld [vmem:[%s0 + $0xa4] sm:$0xff]
  %v1014 = vld [vmem:[%s0 + $0xac] sm:$0xff]
  %v1015 = vld [vmem:[%s0 + $0xb4] sm:$0xff]
  %v1016 = vld [vmem:[%s0 + $0xbc] sm:$0xff]
  %v1017 = vld [vmem:[%s0 + $0xc4] sm:$0xf]
  %v1018 = vpack.c.bf16 %v996, %v995
  %v1019 = vpack.c.bf16 %v998, %v997
  %v1020 = vpack.c.bf16 %v1000, %v999
  %v1021 = vpack.c.bf16 %v1002, %v1001
  %v1022 = vpack.c.bf16 %v1004, %v1003
  %v1023 = vpack.c.bf16 %v1006, %v1005
  %v1024 = vpack.c.bf16 %v1008, %v1007
  %v1025 = vpack.c.bf16 %v1010, %v1009
  %v1026 = vpack.c.bf16 %v1012, %v1011
  %v1027 = vpack.c.bf16 %v1014, %v1013
  %v1028 = vpack.c.bf16 %v1016, %v1015
  %v1029 = vpack.c.bf16 %v1017, %v1017
  %s1030 = scalar_lea.vmem %s1, 48
  %v1031 = vld [vmem:[%s1030] sm:$0xf]
  %v1032 = vld [vmem:[%s1030 + $0x4] sm:$0xf]
  %v1035 = vunpack.c.l.b16 %v1031
  %v1036 = vunpack.c.l.b16 %v1032
  %v1037 = vpack.c.b16 %v1036, %v1035
  %v1040 = vsel %vm96, %v1018, 0
  %v1043 = vsel %vm96, %v1019, 0
  %v1046 = vsel %vm96, %v1020, 0
  %v1049 = vsel %vm96, %v1021, 0
  %v1052 = vsel %vm96, %v1022, 0
  %v1055 = vsel %vm96, %v1023, 0
  %v1058 = vsel %vm96, %v1024, 0
  %v1061 = vsel %vm96, %v1025, 0
  %v1064 = vsel %vm96, %v1026, 0
  %v1067 = vsel %vm96, %v1027, 0
  %v1070 = vsel %vm96, %v1028, 0
  %v1073 = vsel %vm96, %v1029, 0
  %1075 = vmatpush.bf16.msra.mxu0 0
  %1076 = vmatpush.bf16.msra.mxu0 0
  %1077 = vmatpush.bf16.msra.mxu0 0
  %1078 = vmatpush.bf16.msra.mxu0 0
  %1079 = vmatpush.bf16.msra.mxu0 0
  %1080 = vmatpush.bf16.msra.mxu0 0
  %1081 = vmatpush.bf16.msra.mxu0 0
  %1082 = vmatpush.bf16.msra.mxu0 %v1037
  %1083 = vmatmul.bf16.gmra.mxu0 %v1040
  %v1084 = vpop.f32.mrf.mxu0
  %v1085 = vadd.f32 0.0, %v1084
  %v1086 = vpop.f32.mrf.mxu0
  %v1087 = vadd.f32 0.0, %v1086
  %1088 = vmatmul.bf16.gmra.mxu0 %v1043
  %v1089 = vpop.f32.mrf.mxu0
  %v1090 = vadd.f32 0.0, %v1089
  %v1091 = vpop.f32.mrf.mxu0
  %v1092 = vadd.f32 0.0, %v1091
  %1093 = vmatmul.bf16.gmra.mxu0 %v1046
  %v1094 = vpop.f32.mrf.mxu0
  %v1095 = vadd.f32 0.0, %v1094
  %v1096 = vpop.f32.mrf.mxu0
  %v1097 = vadd.f32 0.0, %v1096
  %1098 = vmatmul.bf16.gmra.mxu0 %v1049
  %v1099 = vpop.f32.mrf.mxu0
  %v1100 = vadd.f32 0.0, %v1099
  %v1101 = vpop.f32.mrf.mxu0
  %v1102 = vadd.f32 0.0, %v1101
  %1103 = vmatmul.bf16.gmra.mxu0 %v1052
  %v1104 = vpop.f32.mrf.mxu0
  %v1105 = vadd.f32 0.0, %v1104
  %v1106 = vpop.f32.mrf.mxu0
  %v1107 = vadd.f32 0.0, %v1106
  %1108 = vmatmul.bf16.gmra.mxu0 %v1055
  %v1109 = vpop.f32.mrf.mxu0
  %v1110 = vadd.f32 0.0, %v1109
  %v1111 = vpop.f32.mrf.mxu0
  %v1112 = vadd.f32 0.0, %v1111
  %1113 = vmatmul.bf16.gmra.mxu0 %v1058
  %v1114 = vpop.f32.mrf.mxu0
  %v1115 = vadd.f32 0.0, %v1114
  %v1116 = vpop.f32.mrf.mxu0
  %v1117 = vadd.f32 0.0, %v1116
  %1118 = vmatmul.bf16.gmra.mxu0 %v1061
  %v1119 = vpop.f32.mrf.mxu0
  %v1120 = vadd.f32 0.0, %v1119
  %v1121 = vpop.f32.mrf.mxu0
  %v1122 = vadd.f32 0.0, %v1121
  %1123 = vmatmul.bf16.gmra.mxu0 %v1064
  %v1124 = vpop.f32.mrf.mxu0
  %v1125 = vadd.f32 0.0, %v1124
  %v1126 = vpop.f32.mrf.mxu0
  %v1127 = vadd.f32 0.0, %v1126
  %1128 = vmatmul.bf16.gmra.mxu0 %v1067
  %v1129 = vpop.f32.mrf.mxu0
  %v1130 = vadd.f32 0.0, %v1129
  %v1131 = vpop.f32.mrf.mxu0
  %v1132 = vadd.f32 0.0, %v1131
  %1133 = vmatmul.bf16.gmra.mxu0 %v1070
  %v1134 = vpop.f32.mrf.mxu0
  %v1135 = vadd.f32 0.0, %v1134
  %v1136 = vpop.f32.mrf.mxu0
  %v1137 = vadd.f32 0.0, %v1136
  %1138 = vmatmul.bf16.gmra.mxu0 %v1073
  %v1139 = vpop.f32.mrf.mxu0
  %v1140 = vadd.f32 0.0, %v1139
  %v1141 = vpop.f32.mrf.mxu0
  %1142 = vdwg.mxu0
  %v1143 = vadd.f32 %v972, %v1085
  %v1144 = vadd.f32 %v973, %v1087
  %v1145 = vadd.f32 %v974, %v1090
  %v1146 = vadd.f32 %v975, %v1092
  %v1147 = vadd.f32 %v976, %v1095
  %v1148 = vadd.f32 %v977, %v1097
  %v1149 = vadd.f32 %v978, %v1100
  %v1150 = vadd.f32 %v979, %v1102
  %v1151 = vadd.f32 %v980, %v1105
  %v1152 = vadd.f32 %v981, %v1107
  %v1153 = vadd.f32 %v982, %v1110
  %v1154 = vadd.f32 %v983, %v1112
  %v1155 = vadd.f32 %v984, %v1115
  %v1156 = vadd.f32 %v985, %v1117
  %v1157 = vadd.f32 %v986, %v1120
  %v1158 = vadd.f32 %v987, %v1122
  %v1159 = vadd.f32 %v988, %v1125
  %v1160 = vadd.f32 %v989, %v1127
  %v1161 = vadd.f32 %v990, %v1130
  %v1162 = vadd.f32 %v991, %v1132
  %v1163 = vadd.f32 %v992, %v1135
  %v1164 = vadd.f32 %v993, %v1137
  %v1165 = vadd.f32 %v994, %v1140
  %v1166 = vld [vmem:[%s0 + $0x15] sm:$0xff]
  %v1167 = vld [vmem:[%s0 + $0x1d] sm:$0xff]
  %v1168 = vld [vmem:[%s0 + $0x25] sm:$0xff]
  %v1169 = vld [vmem:[%s0 + $0x2d] sm:$0xff]
  %v1170 = vld [vmem:[%s0 + $0x35] sm:$0xff]
  %v1171 = vld [vmem:[%s0 + $0x3d] sm:$0xff]
  %v1172 = vld [vmem:[%s0 + $0x45] sm:$0xff]
  %v1173 = vld [vmem:[%s0 + $0x4d] sm:$0xff]
  %v1174 = vld [vmem:[%s0 + $0x55] sm:$0xff]
  %v1175 = vld [vmem:[%s0 + $0x5d] sm:$0xff]
  %v1176 = vld [vmem:[%s0 + $0x65] sm:$0xff]
  %v1177 = vld [vmem:[%s0 + $0x6d] sm:$0xff]
  %v1178 = vld [vmem:[%s0 + $0x75] sm:$0xff]
  %v1179 = vld [vmem:[%s0 + $0x7d] sm:$0xff]
  %v1180 = vld [vmem:[%s0 + $0x85] sm:$0xff]
  %v1181 = vld [vmem:[%s0 + $0x8d] sm:$0xff]
  %v1182 = vld [vmem:[%s0 + $0x95] sm:$0xff]
  %v1183 = vld [vmem:[%s0 + $0x9d] sm:$0xff]
  %v1184 = vld [vmem:[%s0 + $0xa5] sm:$0xff]
  %v1185 = vld [vmem:[%s0 + $0xad] sm:$0xff]
  %v1186 = vld [vmem:[%s0 + $0xb5] sm:$0xff]
  %v1187 = vld [vmem:[%s0 + $0xbd] sm:$0xff]
  %v1188 = vld [vmem:[%s0 + $0xc5] sm:$0xf]
  %v1189 = vpack.c.bf16 %v1167, %v1166
  %v1190 = vpack.c.bf16 %v1169, %v1168
  %v1191 = vpack.c.bf16 %v1171, %v1170
  %v1192 = vpack.c.bf16 %v1173, %v1172
  %v1193 = vpack.c.bf16 %v1175, %v1174
  %v1194 = vpack.c.bf16 %v1177, %v1176
  %v1195 = vpack.c.bf16 %v1179, %v1178
  %v1196 = vpack.c.bf16 %v1181, %v1180
  %v1197 = vpack.c.bf16 %v1183, %v1182
  %v1198 = vpack.c.bf16 %v1185, %v1184
  %v1199 = vpack.c.bf16 %v1187, %v1186
  %v1200 = vpack.c.bf16 %v1188, %v1188
  %s1201 = scalar_lea.vmem %s1, 56
  %v1202 = vld [vmem:[%s1201] sm:$0xf]
  %v1203 = vld [vmem:[%s1201 + $0x4] sm:$0xf]
  %v1206 = vunpack.c.l.b16 %v1202
  %v1207 = vunpack.c.l.b16 %v1203
  %v1208 = vpack.c.b16 %v1207, %v1206
  %v1211 = vsel %vm96, %v1189, 0
  %v1214 = vsel %vm96, %v1190, 0
  %v1217 = vsel %vm96, %v1191, 0
  %v1220 = vsel %vm96, %v1192, 0
  %v1223 = vsel %vm96, %v1193, 0
  %v1226 = vsel %vm96, %v1194, 0
  %v1229 = vsel %vm96, %v1195, 0
  %v1232 = vsel %vm96, %v1196, 0
  %v1235 = vsel %vm96, %v1197, 0
  %v1238 = vsel %vm96, %v1198, 0
  %v1241 = vsel %vm96, %v1199, 0
  %v1244 = vsel %vm96, %v1200, 0
  %1246 = vmatpush.bf16.msra.mxu0 0
  %1247 = vmatpush.bf16.msra.mxu0 0
  %1248 = vmatpush.bf16.msra.mxu0 0
  %1249 = vmatpush.bf16.msra.mxu0 0
  %1250 = vmatpush.bf16.msra.mxu0 0
  %1251 = vmatpush.bf16.msra.mxu0 0
  %1252 = vmatpush.bf16.msra.mxu0 0
  %1253 = vmatpush.bf16.msra.mxu0 %v1208
  %1254 = vmatmul.bf16.gmra.mxu0 %v1211
  %v1255 = vpop.f32.mrf.mxu0
  %v1256 = vadd.f32 0.0, %v1255
  %v1257 = vpop.f32.mrf.mxu0
  %v1258 = vadd.f32 0.0, %v1257
  %1259 = vmatmul.bf16.gmra.mxu0 %v1214
  %v1260 = vpop.f32.mrf.mxu0
  %v1261 = vadd.f32 0.0, %v1260
  %v1262 = vpop.f32.mrf.mxu0
  %v1263 = vadd.f32 0.0, %v1262
  %1264 = vmatmul.bf16.gmra.mxu0 %v1217
  %v1265 = vpop.f32.mrf.mxu0
  %v1266 = vadd.f32 0.0, %v1265
  %v1267 = vpop.f32.mrf.mxu0
  %v1268 = vadd.f32 0.0, %v1267
  %1269 = vmatmul.bf16.gmra.mxu0 %v1220
  %v1270 = vpop.f32.mrf.mxu0
  %v1271 = vadd.f32 0.0, %v1270
  %v1272 = vpop.f32.mrf.mxu0
  %v1273 = vadd.f32 0.0, %v1272
  %1274 = vmatmul.bf16.gmra.mxu0 %v1223
  %v1275 = vpop.f32.mrf.mxu0
  %v1276 = vadd.f32 0.0, %v1275
  %v1277 = vpop.f32.mrf.mxu0
  %v1278 = vadd.f32 0.0, %v1277
  %1279 = vmatmul.bf16.gmra.mxu0 %v1226
  %v1280 = vpop.f32.mrf.mxu0
  %v1281 = vadd.f32 0.0, %v1280
  %v1282 = vpop.f32.mrf.mxu0
  %v1283 = vadd.f32 0.0, %v1282
  %1284 = vmatmul.bf16.gmra.mxu0 %v1229
  %v1285 = vpop.f32.mrf.mxu0
  %v1286 = vadd.f32 0.0, %v1285
  %v1287 = vpop.f32.mrf.mxu0
  %v1288 = vadd.f32 0.0, %v1287
  %1289 = vmatmul.bf16.gmra.mxu0 %v1232
  %v1290 = vpop.f32.mrf.mxu0
  %v1291 = vadd.f32 0.0, %v1290
  %v1292 = vpop.f32.mrf.mxu0
  %v1293 = vadd.f32 0.0, %v1292
  %1294 = vmatmul.bf16.gmra.mxu0 %v1235
  %v1295 = vpop.f32.mrf.mxu0
  %v1296 = vadd.f32 0.0, %v1295
  %v1297 = vpop.f32.mrf.mxu0
  %v1298 = vadd.f32 0.0, %v1297
  %1299 = vmatmul.bf16.gmra.mxu0 %v1238
  %v1300 = vpop.f32.mrf.mxu0
  %v1301 = vadd.f32 0.0, %v1300
  %v1302 = vpop.f32.mrf.mxu0
  %v1303 = vadd.f32 0.0, %v1302
  %1304 = vmatmul.bf16.gmra.mxu0 %v1241
  %v1305 = vpop.f32.mrf.mxu0
  %v1306 = vadd.f32 0.0, %v1305
  %v1307 = vpop.f32.mrf.mxu0
  %v1308 = vadd.f32 0.0, %v1307
  %1309 = vmatmul.bf16.gmra.mxu0 %v1244
  %v1310 = vpop.f32.mrf.mxu0
  %v1311 = vadd.f32 0.0, %v1310
  %v1312 = vpop.f32.mrf.mxu0
  %1313 = vdwg.mxu0
  %v1314 = vadd.f32 %v1143, %v1256
  %v1315 = vadd.f32 %v1144, %v1258
  %v1316 = vadd.f32 %v1145, %v1261
  %v1317 = vadd.f32 %v1146, %v1263
  %v1318 = vadd.f32 %v1147, %v1266
  %v1319 = vadd.f32 %v1148, %v1268
  %v1320 = vadd.f32 %v1149, %v1271
  %v1321 = vadd.f32 %v1150, %v1273
  %v1322 = vadd.f32 %v1151, %v1276
  %v1323 = vadd.f32 %v1152, %v1278
  %v1324 = vadd.f32 %v1153, %v1281
  %v1325 = vadd.f32 %v1154, %v1283
  %v1326 = vadd.f32 %v1155, %v1286
  %v1327 = vadd.f32 %v1156, %v1288
  %v1328 = vadd.f32 %v1157, %v1291
  %v1329 = vadd.f32 %v1158, %v1293
  %v1330 = vadd.f32 %v1159, %v1296
  %v1331 = vadd.f32 %v1160, %v1298
  %v1332 = vadd.f32 %v1161, %v1301
  %v1333 = vadd.f32 %v1162, %v1303
  %v1334 = vadd.f32 %v1163, %v1306
  %v1335 = vadd.f32 %v1164, %v1308
  %v1336 = vadd.f32 %v1165, %v1311
  %v1337 = vld [vmem:[%s0 + $0x16] sm:$0xff]
  %v1338 = vld [vmem:[%s0 + $0x1e] sm:$0xff]
  %v1339 = vld [vmem:[%s0 + $0x26] sm:$0xff]
  %v1340 = vld [vmem:[%s0 + $0x2e] sm:$0xff]
  %v1341 = vld [vmem:[%s0 + $0x36] sm:$0xff]
  %v1342 = vld [vmem:[%s0 + $0x3e] sm:$0xff]
  %v1343 = vld [vmem:[%s0 + $0x46] sm:$0xff]
  %v1344 = vld [vmem:[%s0 + $0x4e] sm:$0xff]
  %v1345 = vld [vmem:[%s0 + $0x56] sm:$0xff]
  %v1346 = vld [vmem:[%s0 + $0x5e] sm:$0xff]
  %v1347 = vld [vmem:[%s0 + $0x66] sm:$0xff]
  %v1348 = vld [vmem:[%s0 + $0x6e] sm:$0xff]
  %v1349 = vld [vmem:[%s0 + $0x76] sm:$0xff]
  %v1350 = vld [vmem:[%s0 + $0x7e] sm:$0xff]
  %v1351 = vld [vmem:[%s0 + $0x86] sm:$0xff]
  %v1352 = vld [vmem:[%s0 + $0x8e] sm:$0xff]
  %v1353 = vld [vmem:[%s0 + $0x96] sm:$0xff]
  %v1354 = vld [vmem:[%s0 + $0x9e] sm:$0xff]
  %v1355 = vld [vmem:[%s0 + $0xa6] sm:$0xff]
  %v1356 = vld [vmem:[%s0 + $0xae] sm:$0xff]
  %v1357 = vld [vmem:[%s0 + $0xb6] sm:$0xff]
  %v1358 = vld [vmem:[%s0 + $0xbe] sm:$0xff]
  %v1359 = vld [vmem:[%s0 + $0xc6] sm:$0xf]
  %v1360 = vpack.c.bf16 %v1338, %v1337
  %v1361 = vpack.c.bf16 %v1340, %v1339
  %v1362 = vpack.c.bf16 %v1342, %v1341
  %v1363 = vpack.c.bf16 %v1344, %v1343
  %v1364 = vpack.c.bf16 %v1346, %v1345
  %v1365 = vpack.c.bf16 %v1348, %v1347
  %v1366 = vpack.c.bf16 %v1350, %v1349
  %v1367 = vpack.c.bf16 %v1352, %v1351
  %v1368 = vpack.c.bf16 %v1354, %v1353
  %v1369 = vpack.c.bf16 %v1356, %v1355
  %v1370 = vpack.c.bf16 %v1358, %v1357
  %v1371 = vpack.c.bf16 %v1359, %v1359
  %s1372 = scalar_lea.vmem %s1, 64
  %v1373 = vld [vmem:[%s1372] sm:$0xf]
  %v1374 = vld [vmem:[%s1372 + $0x4] sm:$0xf]
  %v1377 = vunpack.c.l.b16 %v1373
  %v1378 = vunpack.c.l.b16 %v1374
  %v1379 = vpack.c.b16 %v1378, %v1377
  %v1382 = vsel %vm96, %v1360, 0
  %v1385 = vsel %vm96, %v1361, 0
  %v1388 = vsel %vm96, %v1362, 0
  %v1391 = vsel %vm96, %v1363, 0
  %v1394 = vsel %vm96, %v1364, 0
  %v1397 = vsel %vm96, %v1365, 0
  %v1400 = vsel %vm96, %v1366, 0
  %v1403 = vsel %vm96, %v1367, 0
  %v1406 = vsel %vm96, %v1368, 0
  %v1409 = vsel %vm96, %v1369, 0
  %v1412 = vsel %vm96, %v1370, 0
  %v1415 = vsel %vm96, %v1371, 0
  %1417 = vmatpush.bf16.msra.mxu0 0
  %1418 = vmatpush.bf16.msra.mxu0 0
  %1419 = vmatpush.bf16.msra.mxu0 0
  %1420 = vmatpush.bf16.msra.mxu0 0
  %1421 = vmatpush.bf16.msra.mxu0 0
  %1422 = vmatpush.bf16.msra.mxu0 0
  %1423 = vmatpush.bf16.msra.mxu0 0
  %1424 = vmatpush.bf16.msra.mxu0 %v1379
  %1425 = vmatmul.bf16.gmra.mxu0 %v1382
  %v1426 = vpop.f32.mrf.mxu0
  %v1427 = vadd.f32 0.0, %v1426
  %v1428 = vpop.f32.mrf.mxu0
  %v1429 = vadd.f32 0.0, %v1428
  %1430 = vmatmul.bf16.gmra.mxu0 %v1385
  %v1431 = vpop.f32.mrf.mxu0
  %v1432 = vadd.f32 0.0, %v1431
  %v1433 = vpop.f32.mrf.mxu0
  %v1434 = vadd.f32 0.0, %v1433
  %1435 = vmatmul.bf16.gmra.mxu0 %v1388
  %v1436 = vpop.f32.mrf.mxu0
  %v1437 = vadd.f32 0.0, %v1436
  %v1438 = vpop.f32.mrf.mxu0
  %v1439 = vadd.f32 0.0, %v1438
  %1440 = vmatmul.bf16.gmra.mxu0 %v1391
  %v1441 = vpop.f32.mrf.mxu0
  %v1442 = vadd.f32 0.0, %v1441
  %v1443 = vpop.f32.mrf.mxu0
  %v1444 = vadd.f32 0.0, %v1443
  %1445 = vmatmul.bf16.gmra.mxu0 %v1394
  %v1446 = vpop.f32.mrf.mxu0
  %v1447 = vadd.f32 0.0, %v1446
  %v1448 = vpop.f32.mrf.mxu0
  %v1449 = vadd.f32 0.0, %v1448
  %1450 = vmatmul.bf16.gmra.mxu0 %v1397
  %v1451 = vpop.f32.mrf.mxu0
  %v1452 = vadd.f32 0.0, %v1451
  %v1453 = vpop.f32.mrf.mxu0
  %v1454 = vadd.f32 0.0, %v1453
  %1455 = vmatmul.bf16.gmra.mxu0 %v1400
  %v1456 = vpop.f32.mrf.mxu0
  %v1457 = vadd.f32 0.0, %v1456
  %v1458 = vpop.f32.mrf.mxu0
  %v1459 = vadd.f32 0.0, %v1458
  %1460 = vmatmul.bf16.gmra.mxu0 %v1403
  %v1461 = vpop.f32.mrf.mxu0
  %v1462 = vadd.f32 0.0, %v1461
  %v1463 = vpop.f32.mrf.mxu0
  %v1464 = vadd.f32 0.0, %v1463
  %1465 = vmatmul.bf16.gmra.mxu0 %v1406
  %v1466 = vpop.f32.mrf.mxu0
  %v1467 = vadd.f32 0.0, %v1466
  %v1468 = vpop.f32.mrf.mxu0
  %v1469 = vadd.f32 0.0, %v1468
  %1470 = vmatmul.bf16.gmra.mxu0 %v1409
  %v1471 = vpop.f32.mrf.mxu0
  %v1472 = vadd.f32 0.0, %v1471
  %v1473 = vpop.f32.mrf.mxu0
  %v1474 = vadd.f32 0.0, %v1473
  %1475 = vmatmul.bf16.gmra.mxu0 %v1412
  %v1476 = vpop.f32.mrf.mxu0
  %v1477 = vadd.f32 0.0, %v1476
  %v1478 = vpop.f32.mrf.mxu0
  %v1479 = vadd.f32 0.0, %v1478
  %1480 = vmatmul.bf16.gmra.mxu0 %v1415
  %v1481 = vpop.f32.mrf.mxu0
  %v1482 = vadd.f32 0.0, %v1481
  %v1483 = vpop.f32.mrf.mxu0
  %1484 = vdwg.mxu0
  %v1485 = vadd.f32 %v1314, %v1427
  %v1486 = vadd.f32 %v1315, %v1429
  %v1487 = vadd.f32 %v1316, %v1432
  %v1488 = vadd.f32 %v1317, %v1434
  %v1489 = vadd.f32 %v1318, %v1437
  %v1490 = vadd.f32 %v1319, %v1439
  %v1491 = vadd.f32 %v1320, %v1442
  %v1492 = vadd.f32 %v1321, %v1444
  %v1493 = vadd.f32 %v1322, %v1447
  %v1494 = vadd.f32 %v1323, %v1449
  %v1495 = vadd.f32 %v1324, %v1452
  %v1496 = vadd.f32 %v1325, %v1454
  %v1497 = vadd.f32 %v1326, %v1457
  %v1498 = vadd.f32 %v1327, %v1459
  %v1499 = vadd.f32 %v1328, %v1462
  %v1500 = vadd.f32 %v1329, %v1464
  %v1501 = vadd.f32 %v1330, %v1467
  %v1502 = vadd.f32 %v1331, %v1469
  %v1503 = vadd.f32 %v1332, %v1472
  %v1504 = vadd.f32 %v1333, %v1474
  %v1505 = vadd.f32 %v1334, %v1477
  %v1506 = vadd.f32 %v1335, %v1479
  %v1507 = vadd.f32 %v1336, %v1482
  %v1508 = vld [vmem:[%s2] sm:$0x1]
  %v1510 = vperm.slane %v1508, 0
  %v1512 = vadd.f32 %v1485, %v1510
  %v1513 = vadd.f32 %v1486, %v1510
  %v1514 = vadd.f32 %v1487, %v1510
  %v1515 = vadd.f32 %v1488, %v1510
  %v1516 = vadd.f32 %v1489, %v1510
  %v1517 = vadd.f32 %v1490, %v1510
  %v1518 = vadd.f32 %v1491, %v1510
  %v1519 = vadd.f32 %v1492, %v1510
  %v1520 = vadd.f32 %v1493, %v1510
  %v1521 = vadd.f32 %v1494, %v1510
  %v1522 = vadd.f32 %v1495, %v1510
  %v1523 = vadd.f32 %v1496, %v1510
  %v1524 = vadd.f32 %v1497, %v1510
  %v1525 = vadd.f32 %v1498, %v1510
  %v1526 = vadd.f32 %v1499, %v1510
  %v1527 = vadd.f32 %v1500, %v1510
  %v1528 = vadd.f32 %v1501, %v1510
  %v1529 = vadd.f32 %v1502, %v1510
  %v1530 = vadd.f32 %v1503, %v1510
  %v1531 = vadd.f32 %v1504, %v1510
  %v1532 = vadd.f32 %v1505, %v1510
  %v1533 = vadd.f32 %v1506, %v1510
  %v1534 = vadd.f32 %v1507, %v1510
  %v1535 = vpack.c.bf16 %v1512, %v1512
  %v1536 = vpack.c.bf16 %v1513, %v1513
  %v1537 = vpack.c.bf16 %v1514, %v1514
  %v1538 = vpack.c.bf16 %v1515, %v1515
  %v1539 = vpack.c.bf16 %v1516, %v1516
  %v1540 = vpack.c.bf16 %v1517, %v1517
  %v1541 = vpack.c.bf16 %v1518, %v1518
  %v1542 = vpack.c.bf16 %v1519, %v1519
  %v1543 = vpack.c.bf16 %v1520, %v1520
  %v1544 = vpack.c.bf16 %v1521, %v1521
  %v1545 = vpack.c.bf16 %v1522, %v1522
  %v1546 = vpack.c.bf16 %v1523, %v1523
  %v1547 = vpack.c.bf16 %v1524, %v1524
  %v1548 = vpack.c.bf16 %v1525, %v1525
  %v1549 = vpack.c.bf16 %v1526, %v1526
  %v1550 = vpack.c.bf16 %v1527, %v1527
  %v1551 = vpack.c.bf16 %v1528, %v1528
  %v1552 = vpack.c.bf16 %v1529, %v1529
  %v1553 = vpack.c.bf16 %v1530, %v1530
  %v1554 = vpack.c.bf16 %v1531, %v1531
  %v1555 = vpack.c.bf16 %v1532, %v1532
  %v1556 = vpack.c.bf16 %v1533, %v1533
  %v1557 = vpack.c.bf16 %v1534, %v1534
  %vm1558 = vcmask 257024
  %1559 = vst.msk [vmem:[%s3] sm:$0xf] %vm1558, %v1535
  %1560 = vst.msk [vmem:[%s3 + $0x4] sm:$0xf] %vm1558, %v1536
  %1561 = vst.msk [vmem:[%s3 + $0x8] sm:$0xf] %vm1558, %v1537
  %1562 = vst.msk [vmem:[%s3 + $0xc] sm:$0xf] %vm1558, %v1538
  %1563 = vst.msk [vmem:[%s3 + $0x10] sm:$0xf] %vm1558, %v1539
  %1564 = vst.msk [vmem:[%s3 + $0x14] sm:$0xf] %vm1558, %v1540
  %1565 = vst.msk [vmem:[%s3 + $0x18] sm:$0xf] %vm1558, %v1541
  %1566 = vst.msk [vmem:[%s3 + $0x1c] sm:$0xf] %vm1558, %v1542
  %1567 = vst.msk [vmem:[%s3 + $0x20] sm:$0xf] %vm1558, %v1543
  %1568 = vst.msk [vmem:[%s3 + $0x24] sm:$0xf] %vm1558, %v1544
  %1569 = vst.msk [vmem:[%s3 + $0x28] sm:$0xf] %vm1558, %v1545
  %1570 = vst.msk [vmem:[%s3 + $0x2c] sm:$0xf] %vm1558, %v1546
  %1571 = vst.msk [vmem:[%s3 + $0x30] sm:$0xf] %vm1558, %v1547
  %1572 = vst.msk [vmem:[%s3 + $0x34] sm:$0xf] %vm1558, %v1548
  %1573 = vst.msk [vmem:[%s3 + $0x38] sm:$0xf] %vm1558, %v1549
  %1574 = vst.msk [vmem:[%s3 + $0x3c] sm:$0xf] %vm1558, %v1550
  %1575 = vst.msk [vmem:[%s3 + $0x40] sm:$0xf] %vm1558, %v1551
  %1576 = vst.msk [vmem:[%s3 + $0x44] sm:$0xf] %vm1558, %v1552
  %1577 = vst.msk [vmem:[%s3 + $0x48] sm:$0xf] %vm1558, %v1553
  %1578 = vst.msk [vmem:[%s3 + $0x4c] sm:$0xf] %vm1558, %v1554
  %1579 = vst.msk [vmem:[%s3 + $0x50] sm:$0xf] %vm1558, %v1555
  %1580 = vst.msk [vmem:[%s3 + $0x54] sm:$0xf] %vm1558, %v1556
  %vm1581 = vcmask 254976
  %1582 = vst.msk [vmem:[%s3 + $0x58] sm:$0x3] %vm1581, %v1557
  // Predicated region
  $region14: #{tpu_custom_call.1} parent=0 // pred_check
    _
  $region15: #{tpu_custom_call.1} parent=0 // pred_check_branch
    %1584 = sbr.rel (0) target = $region17
  $region16: #{tpu_custom_call.1} parent=0 // pred_region
    _
  $region17: #{tpu_custom_call.1} parent=0 // pred_fallthru
    _
  // Predicated region
  $region18: #{tpu_custom_call.1} parent=0 // pred_check
    _
  $region19: #{tpu_custom_call.1} parent=0 // pred_check_branch
    %1586 = sbr.rel (0) target = $region21
  $region20: #{tpu_custom_call.1} parent=0 // pred_region
    _
  $region21: #{tpu_custom_call.1} parent=0 // pred_fallthru
    _

</llo_original>
